<compile_context>
chip_gen: v6e
topology: v6e:2x2x1
jax: 0.10.0
libtpu: 0.0.40
codegen_flags: <defaults>
</compile_context>

<pallas_src>
import functools

import jax
import jax.numpy as jnp
from jax.experimental import pallas as pl
from jax.experimental.pallas import tpu as pltpu


# ----------------------------------------------------------------------------
# Kernel 1: patch classifier.
#   xt_ref : (1, D, TP)   transposed patches for one batch element, one tile
#   wt_ref : (K, D)       classifier weight, transposed (constant block)
#   b_ref  : (K, 1)       bias (constant block)
#   o_ref  : (1, K, TP)   lane-dense logits tile (lane dim = TP)
# ----------------------------------------------------------------------------
def _classify_kernel(xt_ref, wt_ref, b_ref, o_ref):
    o_ref[0] = (
        jnp.dot(wt_ref[...], xt_ref[0], preferred_element_type=jnp.float32)
        + b_ref[...]
    )


def classify_patches(patches_t, weight_t, bias, *, tile_p=None):
    """patches_t: (B, D, P) -> logits (B, K, P) with P = h*w."""
    B, D, P = patches_t.shape
    K = weight_t.shape[0]
    if tile_p is None:
        tile_p = min(P, 2048)
    # TPU tiling rule: last block dim must be a multiple of 128 or the full dim.
    assert tile_p == P or tile_p % 128 == 0, (tile_p, P)

    return pl.pallas_call(
        _classify_kernel,
        out_shape=jax.ShapeDtypeStruct((B, K, P), jnp.float32),
        grid=(B, pl.cdiv(P, tile_p)),
        in_specs=[
            pl.BlockSpec((1, D, tile_p), lambda b, i: (b, 0, i)),
            pl.BlockSpec((K, D), lambda b, i: (0, 0)),
            pl.BlockSpec((K, 1), lambda b, i: (0, 0)),
        ],
        out_specs=pl.BlockSpec((1, K, tile_p), lambda b, i: (b, 0, i)),
        compiler_params=pltpu.CompilerParams(
            dimension_semantics=("parallel", "parallel"),
            vmem_limit_bytes=32 * 1024 * 1024,
        ),
    )(patches_t, weight_t, bias.reshape(K, 1))


# ----------------------------------------------------------------------------
# Kernel 2: exact bilinear upsample, `group` planes per grid step.
#   low_ref : (group*h, w)   flattened low-res planes for this group
#   ah_ref  : (H, h)         height interpolation matrix (constant block)
#   awt_ref : (w, W)         width interpolation matrix, pre-transposed
#   out_ref : (group, H, W)
# Width resize is a single (group*h, w) @ (w, W) matmul; height resize is a
# short static loop of (H, h) @ (h, W) matmuls.
# ----------------------------------------------------------------------------
def _bilinear_kernel(low_ref, ah_ref, awt_ref, out_ref, *, group, h):
    tmp = jnp.dot(low_ref[...], awt_ref[...],
                  preferred_element_type=jnp.float32)          # (group*h, W)
    for g in range(group):                                     # static unroll
        out_ref[g] = jnp.dot(ah_ref[...], tmp[g * h:(g + 1) * h, :],
                             preferred_element_type=jnp.float32)


def bilinear_upsample(low, a_h, a_wt, *, max_group=8,
                      vmem_budget_bytes=8 * 1024 * 1024):
    """low: (N, h, w) -> (N, H, W) with exact bilinear interpolation."""
    N, h, w = low.shape
    H = a_h.shape[0]
    W = a_wt.shape[1]

    # Pick the plane-group size: largest divisor of N that keeps the
    # double-buffered in/out blocks within the budget (v7x VMEM is 64 MiB).
    per_plane = 4 * (h * w + H * W)
    g_fit = max(1, vmem_budget_bytes // (2 * per_plane))
    g_cap = int(min(max_group, g_fit, N))
    group = 1
    for g in range(g_cap, 0, -1):
        if N % g == 0:
            group = g
            break

    low_flat = low.reshape(N * h, w)           # free view (no data movement)
    kern = functools.partial(_bilinear_kernel, group=group, h=h)

    return pl.pallas_call(
        kern,
        out_shape=jax.ShapeDtypeStruct((N, H, W), jnp.float32),
        grid=(N // group,),
        in_specs=[
            pl.BlockSpec((group * h, w), lambda g: (g, 0)),
            pl.BlockSpec((H, h), lambda g: (0, 0)),
            pl.BlockSpec((w, W), lambda g: (0, 0)),
        ],
        out_specs=pl.BlockSpec((group, H, W), lambda g: (g, 0, 0)),
        compiler_params=pltpu.CompilerParams(
            dimension_semantics=("parallel",),
            vmem_limit_bytes=32 * 1024 * 1024,
        ),
    )(low_flat, a_h, a_wt)


# ----------------------------------------------------------------------------
# Glue: interpolation matrices + patch extraction (plain JAX)
# ----------------------------------------------------------------------------
def _make_bilinear_matrix(out_size: int, in_size: int) -> jnp.ndarray:
    """Interpolation matrix matching PyTorch bilinear, align_corners=False."""
    scale = in_size / out_size
    dst = jnp.arange(out_size, dtype=jnp.float32)
    src = scale * (dst + 0.5) - 0.5
    src = jnp.maximum(src, 0.0)                      # PyTorch clamps to 0
    x0 = jnp.floor(src).astype(jnp.int32)
    x0 = jnp.minimum(x0, in_size - 1)
    x1 = jnp.minimum(x0 + 1, in_size - 1)
    lam = src - x0.astype(jnp.float32)
    oh0 = jax.nn.one_hot(x0, in_size, dtype=jnp.float32)
    oh1 = jax.nn.one_hot(x1, in_size, dtype=jnp.float32)
    return (1.0 - lam)[:, None] * oh0 + lam[:, None] * oh1   # (out, in)


def segformer_wrapper_forward(images, w_patch, b_patch, patch=4, tile_p=None):
    """images: (B, C, H, W) f32 -> logits: (B, K, H, W) f32."""
    B, C, H, W = images.shape
    h, w = H // patch, W // patch
    D = C * patch * patch
    K = w_patch.shape[1]

    # TODO(synk): move this patchify transpose into kernel 1 to avoid the one
    # remaining full-image HBM round trip outside Pallas.
    x = images.reshape(B, C, h, patch, w, patch)
    x = jnp.transpose(x, (0, 1, 3, 5, 2, 4))          # (B, C, p, q, h, w)
    patches_t = x.reshape(B, D, h * w)                # D index = c*16 + p*4 + q

    # synthetic "model(images).logits" at (H/4, W/4) resolution, plane-major
    logits_low = classify_patches(patches_t, w_patch.T, b_patch,
                                  tile_p=tile_p)      # (B, K, h*w)

    # _upscale_logits: bilinear resize to images.shape[2:]
    a_h = _make_bilinear_matrix(H, h)                 # (H, h)
    a_wt = _make_bilinear_matrix(W, w).T              # (w, W), pre-transposed
    low_planes = logits_low.reshape(B * K, h, w)      # free view
    up = bilinear_upsample(low_planes, a_h, a_wt)     # (B*K, H, W)
    return up.reshape(B, K, H, W)                     # free view (NCHW out)


if __name__ == "__main__":
    key = jax.random.PRNGKey(0)
    k_img, k_w, k_b = jax.random.split(key, 3)

    B, C, H, W = 2, 4, 64, 64
    K = 8          # num_classes
    PATCH = 4

    images = jax.random.normal(k_img, (B, C, H, W), dtype=jnp.float32)
    w_patch = (jax.random.normal(k_w, (C * PATCH * PATCH, K), dtype=jnp.float32)
               * 0.05)
    b_patch = jax.random.normal(k_b, (K,), dtype=jnp.float32) * 0.01

    fwd = jax.jit(functools.partial(segformer_wrapper_forward,
                                    patch=PATCH, tile_p=128))
    logits = jax.block_until_ready(fwd(images, w_patch, b_patch))

    assert logits.shape == (B, K, H, W), logits.shape
    assert logits.dtype == jnp.float32

    # Pure-JAX reference (same math) for a quick self-check.
    h, w = H // PATCH, W // PATCH
    xr = images.reshape(B, C, h, PATCH, w, PATCH).transpose(0, 2, 4, 1, 3, 5)
    patches = xr.reshape(B * h * w, C * PATCH * PATCH)
    low_ref = (patches @ w_patch + b_patch).reshape(B, h, w, K)
    low_ref = low_ref.transpose(0, 3, 1, 2)                       # (B, K, h, w)
    a_h_ref = _make_bilinear_matrix(H, h)
    a_w_ref = _make_bilinear_matrix(W, w)
    ref = jnp.einsum("Hh,bkhw,Ww->bkHW", a_h_ref, low_ref, a_w_ref)
    err = float(jnp.max(jnp.abs(logits - ref)))
    assert jnp.allclose(logits, ref, atol=1e-3, rtol=1e-3), err

    print("KERNEL_OK")
</pallas_src>

<mosaic_0001>
module attributes {stable_mosaic.version = 11 : i64} {
  func.func @_classify_kernel(%arg0: i32, %arg1: i32, %arg2: memref<1x64x128xf32, #tpu.memory_space<vmem>>, %arg3: memref<8x64xf32, #tpu.memory_space<vmem>>, %arg4: memref<8x1xf32, #tpu.memory_space<vmem>>, %arg5: memref<1x8x128xf32, #tpu.memory_space<vmem>>) attributes {dimension_semantics = [#tpu.dimension_semantics<parallel>, #tpu.dimension_semantics<parallel>], iteration_bounds = array<i64: 2, 2>, scalar_prefetch = 0 : i64, scratch_operands = 0 : i64, tpu.core_type = #tpu.core_type<tc>, window_params = [{transform_indices = @transform_0, window_bounds = array<i64: 1, 64, 128>}, {pipeline_mode = #tpu.pipeline_mode<synchronous>, transform_indices = @transform_1, window_bounds = array<i64: 8, 64>}, {pipeline_mode = #tpu.pipeline_mode<synchronous>, transform_indices = @transform_2, window_bounds = array<i64: 8, 1>}, {transform_indices = @transform_3, window_bounds = array<i64: 1, 8, 128>}]} {
    %c0 = arith.constant 0 : index
    %c0_0 = arith.constant 0 : index
    %0 = vector.load %arg3[%c0, %c0_0] : memref<8x64xf32, #tpu.memory_space<vmem>>, vector<8x64xf32>
    %c0_1 = arith.constant 0 : index
    %c0_2 = arith.constant 0 : index
    %c0_3 = arith.constant 0 : index
    %1 = vector.load %arg2[%c0_1, %c0_2, %c0_3] : memref<1x64x128xf32, #tpu.memory_space<vmem>>, vector<1x64x128xf32>
    %2 = vector.shape_cast %1 : vector<1x64x128xf32> to vector<64x128xf32>
    %cst = arith.constant dense<0.000000e+00> : vector<8x128xf32>
    %3 = tpu.matmul %0, %2, %cst {dimension_numbers = #tpu.dot_dimension_numbers<[1], [0], [0], [1], [0, 0, 1, 1], [], []>} : vector<8x64xf32>, vector<64x128xf32>, vector<8x128xf32> -> vector<8x128xf32>
    %c0_4 = arith.constant 0 : index
    %c0_5 = arith.constant 0 : index
    %4 = vector.load %arg4[%c0_4, %c0_5] : memref<8x1xf32, #tpu.memory_space<vmem>>, vector<8x1xf32>
    %5 = vector.broadcast %4 : vector<8x1xf32> to vector<8x128xf32>
    %6 = arith.addf %3, %5 : vector<8x128xf32>
    %c0_6 = arith.constant 0 : index
    %c0_7 = arith.constant 0 : index
    %c0_8 = arith.constant 0 : index
    %7 = vector.load %arg5[%c0_6, %c0_7, %c0_8] : memref<1x8x128xf32, #tpu.memory_space<vmem>>, vector<1x8x128xf32>
    %8 = vector.shape_cast %7 : vector<1x8x128xf32> to vector<8x128xf32>
    %9 = vector.shape_cast %6 : vector<8x128xf32> to vector<1x8x128xf32>
    tpu.vector_store %arg5[%c0_6, %c0_7, %c0_8], %9 {strides = array<i32>} : memref<1x8x128xf32, #tpu.memory_space<vmem>>, vector<1x8x128xf32>,
    return
  }
  func.func @transform_0(%arg0: i32, %arg1: i32) -> (i32, i32, i32) {
    %c0_i32 = arith.constant 0 : i32
    %c0_i32_0 = arith.constant 0 : i32
    return %arg0, %c0_i32, %arg1 : i32, i32, i32
  }
  func.func @transform_1(%arg0: i32, %arg1: i32) -> (i32, i32) {
    %c0_i32 = arith.constant 0 : i32
    %c0_i32_0 = arith.constant 0 : i32
    %c0_i32_1 = arith.constant 0 : i32
    return %c0_i32, %c0_i32_0 : i32, i32
  }
  func.func @transform_2(%arg0: i32, %arg1: i32) -> (i32, i32) {
    %c0_i32 = arith.constant 0 : i32
    %c0_i32_0 = arith.constant 0 : i32
    %c0_i32_1 = arith.constant 0 : i32
    return %c0_i32, %c0_i32_0 : i32, i32
  }
  func.func @transform_3(%arg0: i32, %arg1: i32) -> (i32, i32, i32) {
    %c0_i32 = arith.constant 0 : i32
    %c0_i32_0 = arith.constant 0 : i32
    return %arg0, %c0_i32, %arg1 : i32, i32, i32
  }
}

module attributes {stable_mosaic.version = 11 : i64} {
  func.func @_bilinear_kernel(%arg0: i32, %arg1: memref<128x16xf32, #tpu.memory_space<vmem>>, %arg2: memref<64x16xf32, #tpu.memory_space<vmem>>, %arg3: memref<16x64xf32, #tpu.memory_space<vmem>>, %arg4: memref<8x64x64xf32, #tpu.memory_space<vmem>>) attributes {dimension_semantics = [#tpu.dimension_semantics<parallel>], iteration_bounds = array<i64: 2>, scalar_prefetch = 0 : i64, scratch_operands = 0 : i64, tpu.core_type = #tpu.core_type<tc>, window_params = [{transform_indices = @transform_0, window_bounds = array<i64: 128, 16>}, {pipeline_mode = #tpu.pipeline_mode<synchronous>, transform_indices = @transform_1, window_bounds = array<i64: 64, 16>}, {pipeline_mode = #tpu.pipeline_mode<synchronous>, transform_indices = @transform_2, window_bounds = array<i64: 16, 64>}, {transform_indices = @transform_3, window_bounds = array<i64: 8, 64, 64>}]} {
    %c0 = arith.constant 0 : index
    %c0_0 = arith.constant 0 : index
    %0 = vector.load %arg1[%c0, %c0_0] : memref<128x16xf32, #tpu.memory_space<vmem>>, vector<128x16xf32>
    %c0_1 = arith.constant 0 : index
    %c0_2 = arith.constant 0 : index
    %1 = vector.load %arg3[%c0_1, %c0_2] : memref<16x64xf32, #tpu.memory_space<vmem>>, vector<16x64xf32>
    %cst = arith.constant dense<0.000000e+00> : vector<128x64xf32>
    %2 = tpu.matmul %0, %1, %cst {dimension_numbers = #tpu.dot_dimension_numbers<[1], [0], [0], [1], [0, 0, 1, 1], [], []>} : vector<128x16xf32>, vector<16x64xf32>, vector<128x64xf32> -> vector<128x64xf32>
    %c0_3 = arith.constant 0 : index
    %c0_4 = arith.constant 0 : index
    %3 = vector.load %arg2[%c0_3, %c0_4] : memref<64x16xf32, #tpu.memory_space<vmem>>, vector<64x16xf32>
    %4 = vector.extract_strided_slice %2 {offsets = [0, 0], sizes = [16, 64], strides = [1, 1]} : vector<128x64xf32> to vector<16x64xf32>
    %cst_5 = arith.constant dense<0.000000e+00> : vector<64x64xf32>
    %5 = tpu.matmul %3, %4, %cst_5 {dimension_numbers = #tpu.dot_dimension_numbers<[1], [0], [0], [1], [0, 0, 1, 1], [], []>} : vector<64x16xf32>, vector<16x64xf32>, vector<64x64xf32> -> vector<64x64xf32>
    %c0_6 = arith.constant 0 : index
    %c0_7 = arith.constant 0 : index
    %c0_8 = arith.constant 0 : index
    %6 = vector.load %arg4[%c0_6, %c0_7, %c0_8] : memref<8x64x64xf32, #tpu.memory_space<vmem>>, vector<1x64x64xf32>
    %7 = vector.shape_cast %6 : vector<1x64x64xf32> to vector<64x64xf32>
    %8 = vector.shape_cast %5 : vector<64x64xf32> to vector<1x64x64xf32>
    tpu.vector_store %arg4[%c0_6, %c0_7, %c0_8], %8 {strides = array<i32>} : memref<8x64x64xf32, #tpu.memory_space<vmem>>, vector<1x64x64xf32>,
    %c0_9 = arith.constant 0 : index
    %c0_10 = arith.constant 0 : index
    %9 = vector.load %arg2[%c0_9, %c0_10] : memref<64x16xf32, #tpu.memory_space<vmem>>, vector<64x16xf32>
    %10 = vector.extract_strided_slice %2 {offsets = [16, 0], sizes = [16, 64], strides = [1, 1]} : vector<128x64xf32> to vector<16x64xf32>
    %cst_11 = arith.constant dense<0.000000e+00> : vector<64x64xf32>
    %11 = tpu.matmul %9, %10, %cst_11 {dimension_numbers = #tpu.dot_dimension_numbers<[1], [0], [0], [1], [0, 0, 1, 1], [], []>} : vector<64x16xf32>, vector<16x64xf32>, vector<64x64xf32> -> vector<64x64xf32>
    %c1 = arith.constant 1 : index
    %c0_12 = arith.constant 0 : index
    %c0_13 = arith.constant 0 : index
    %12 = vector.load %arg4[%c1, %c0_12, %c0_13] : memref<8x64x64xf32, #tpu.memory_space<vmem>>, vector<1x64x64xf32>
    %13 = vector.shape_cast %12 : vector<1x64x64xf32> to vector<64x64xf32>
    %14 = vector.shape_cast %11 : vector<64x64xf32> to vector<1x64x64xf32>
    tpu.vector_store %arg4[%c1, %c0_12, %c0_13], %14 {strides = array<i32>} : memref<8x64x64xf32, #tpu.memory_space<vmem>>, vector<1x64x64xf32>,
    %c0_14 = arith.constant 0 : index
    %c0_15 = arith.constant 0 : index
    %15 = vector.load %arg2[%c0_14, %c0_15] : memref<64x16xf32, #tpu.memory_space<vmem>>, vector<64x16xf32>
    %16 = vector.extract_strided_slice %2 {offsets = [32, 0], sizes = [16, 64], strides = [1, 1]} : vector<128x64xf32> to vector<16x64xf32>
    %cst_16 = arith.constant dense<0.000000e+00> : vector<64x64xf32>
    %17 = tpu.matmul %15, %16, %cst_16 {dimension_numbers = #tpu.dot_dimension_numbers<[1], [0], [0], [1], [0, 0, 1, 1], [], []>} : vector<64x16xf32>, vector<16x64xf32>, vector<64x64xf32> -> vector<64x64xf32>
    %c2 = arith.constant 2 : index
    %c0_17 = arith.constant 0 : index
    %c0_18 = arith.constant 0 : index
    %18 = vector.load %arg4[%c2, %c0_17, %c0_18] : memref<8x64x64xf32, #tpu.memory_space<vmem>>, vector<1x64x64xf32>
    %19 = vector.shape_cast %18 : vector<1x64x64xf32> to vector<64x64xf32>
    %20 = vector.shape_cast %17 : vector<64x64xf32> to vector<1x64x64xf32>
    tpu.vector_store %arg4[%c2, %c0_17, %c0_18], %20 {strides = array<i32>} : memref<8x64x64xf32, #tpu.memory_space<vmem>>, vector<1x64x64xf32>,
    %c0_19 = arith.constant 0 : index
    %c0_20 = arith.constant 0 : index
    %21 = vector.load %arg2[%c0_19, %c0_20] : memref<64x16xf32, #tpu.memory_space<vmem>>, vector<64x16xf32>
    %22 = vector.extract_strided_slice %2 {offsets = [48, 0], sizes = [16, 64], strides = [1, 1]} : vector<128x64xf32> to vector<16x64xf32>
    %cst_21 = arith.constant dense<0.000000e+00> : vector<64x64xf32>
    %23 = tpu.matmul %21, %22, %cst_21 {dimension_numbers = #tpu.dot_dimension_numbers<[1], [0], [0], [1], [0, 0, 1, 1], [], []>} : vector<64x16xf32>, vector<16x64xf32>, vector<64x64xf32> -> vector<64x64xf32>
    %c3 = arith.constant 3 : index
    %c0_22 = arith.constant 0 : index
    %c0_23 = arith.constant 0 : index
    %24 = vector.load %arg4[%c3, %c0_22, %c0_23] : memref<8x64x64xf32, #tpu.memory_space<vmem>>, vector<1x64x64xf32>
    %25 = vector.shape_cast %24 : vector<1x64x64xf32> to vector<64x64xf32>
    %26 = vector.shape_cast %23 : vector<64x64xf32> to vector<1x64x64xf32>
    tpu.vector_store %arg4[%c3, %c0_22, %c0_23], %26 {strides = array<i32>} : memref<8x64x64xf32, #tpu.memory_space<vmem>>, vector<1x64x64xf32>,
    %c0_24 = arith.constant 0 : index
    %c0_25 = arith.constant 0 : index
    %27 = vector.load %arg2[%c0_24, %c0_25] : memref<64x16xf32, #tpu.memory_space<vmem>>, vector<64x16xf32>
    %28 = vector.extract_strided_slice %2 {offsets = [64, 0], sizes = [16, 64], strides = [1, 1]} : vector<128x64xf32> to vector<16x64xf32>
    %cst_26 = arith.constant dense<0.000000e+00> : vector<64x64xf32>
    %29 = tpu.matmul %27, %28, %cst_26 {dimension_numbers = #tpu.dot_dimension_numbers<[1], [0], [0], [1], [0, 0, 1, 1], [], []>} : vector<64x16xf32>, vector<16x64xf32>, vector<64x64xf32> -> vector<64x64xf32>
    %c4 = arith.constant 4 : index
    %c0_27 = arith.constant 0 : index
    %c0_28 = arith.constant 0 : index
    %30 = vector.load %arg4[%c4, %c0_27, %c0_28] : memref<8x64x64xf32, #tpu.memory_space<vmem>>, vector<1x64x64xf32>
    %31 = vector.shape_cast %30 : vector<1x64x64xf32> to vector<64x64xf32>
    %32 = vector.shape_cast %29 : vector<64x64xf32> to vector<1x64x64xf32>
    tpu.vector_store %arg4[%c4, %c0_27, %c0_28], %32 {strides = array<i32>} : memref<8x64x64xf32, #tpu.memory_space<vmem>>, vector<1x64x64xf32>,
    %c0_29 = arith.constant 0 : index
    %c0_30 = arith.constant 0 : index
    %33 = vector.load %arg2[%c0_29, %c0_30] : memref<64x16xf32, #tpu.memory_space<vmem>>, vector<64x16xf32>
    %34 = vector.extract_strided_slice %2 {offsets = [80, 0], sizes = [16, 64], strides = [1, 1]} : vector<128x64xf32> to vector<16x64xf32>
    %cst_31 = arith.constant dense<0.000000e+00> : vector<64x64xf32>
    %35 = tpu.matmul %33, %34, %cst_31 {dimension_numbers = #tpu.dot_dimension_numbers<[1], [0], [0], [1], [0, 0, 1, 1], [], []>} : vector<64x16xf32>, vector<16x64xf32>, vector<64x64xf32> -> vector<64x64xf32>
    %c5 = arith.constant 5 : index
    %c0_32 = arith.constant 0 : index
    %c0_33 = arith.constant 0 : index
    %36 = vector.load %arg4[%c5, %c0_32, %c0_33] : memref<8x64x64xf32, #tpu.memory_space<vmem>>, vector<1x64x64xf32>
    %37 = vector.shape_cast %36 : vector<1x64x64xf32> to vector<64x64xf32>
    %38 = vector.shape_cast %35 : vector<64x64xf32> to vector<1x64x64xf32>
    tpu.vector_store %arg4[%c5, %c0_32, %c0_33], %38 {strides = array<i32>} : memref<8x64x64xf32, #tpu.memory_space<vmem>>, vector<1x64x64xf32>,
    %c0_34 = arith.constant 0 : index
    %c0_35 = arith.constant 0 : index
    %39 = vector.load %arg2[%c0_34, %c0_35] : memref<64x16xf32, #tpu.memory_space<vmem>>, vector<64x16xf32>
    %40 = vector.extract_strided_slice %2 {offsets = [96, 0], sizes = [16, 64], strides = [1, 1]} : vector<128x64xf32> to vector<16x64xf32>
    %cst_36 = arith.constant dense<0.000000e+00> : vector<64x64xf32>
    %41 = tpu.matmul %39, %40, %cst_36 {dimension_numbers = #tpu.dot_dimension_numbers<[1], [0], [0], [1], [0, 0, 1, 1], [], []>} : vector<64x16xf32>, vector<16x64xf32>, vector<64x64xf32> -> vector<64x64xf32>
    %c6 = arith.constant 6 : index
    %c0_37 = arith.constant 0 : index
    %c0_38 = arith.constant 0 : index
    %42 = vector.load %arg4[%c6, %c0_37, %c0_38] : memref<8x64x64xf32, #tpu.memory_space<vmem>>, vector<1x64x64xf32>
    %43 = vector.shape_cast %42 : vector<1x64x64xf32> to vector<64x64xf32>
    %44 = vector.shape_cast %41 : vector<64x64xf32> to vector<1x64x64xf32>
    tpu.vector_store %arg4[%c6, %c0_37, %c0_38], %44 {strides = array<i32>} : memref<8x64x64xf32, #tpu.memory_space<vmem>>, vector<1x64x64xf32>,
    %c0_39 = arith.constant 0 : index
    %c0_40 = arith.constant 0 : index
    %45 = vector.load %arg2[%c0_39, %c0_40] : memref<64x16xf32, #tpu.memory_space<vmem>>, vector<64x16xf32>
    %46 = vector.extract_strided_slice %2 {offsets = [112, 0], sizes = [16, 64], strides = [1, 1]} : vector<128x64xf32> to vector<16x64xf32>
    %cst_41 = arith.constant dense<0.000000e+00> : vector<64x64xf32>
    %47 = tpu.matmul %45, %46, %cst_41 {dimension_numbers = #tpu.dot_dimension_numbers<[1], [0], [0], [1], [0, 0, 1, 1], [], []>} : vector<64x16xf32>, vector<16x64xf32>, vector<64x64xf32> -> vector<64x64xf32>
    %c7 = arith.constant 7 : index
    %c0_42 = arith.constant 0 : index
    %c0_43 = arith.constant 0 : index
    %48 = vector.load %arg4[%c7, %c0_42, %c0_43] : memref<8x64x64xf32, #tpu.memory_space<vmem>>, vector<1x64x64xf32>
    %49 = vector.shape_cast %48 : vector<1x64x64xf32> to vector<64x64xf32>
    %50 = vector.shape_cast %47 : vector<64x64xf32> to vector<1x64x64xf32>
    tpu.vector_store %arg4[%c7, %c0_42, %c0_43], %50 {strides = array<i32>} : memref<8x64x64xf32, #tpu.memory_space<vmem>>, vector<1x64x64xf32>,
    return
  }
  func.func @transform_0(%arg0: i32) -> (i32, i32) {
    %c0_i32 = arith.constant 0 : i32
    %c0_i32_0 = arith.constant 0 : i32
    return %arg0, %c0_i32 : i32, i32
  }
  func.func @transform_1(%arg0: i32) -> (i32, i32) {
    %c0_i32 = arith.constant 0 : i32
    %c0_i32_0 = arith.constant 0 : i32
    %c0_i32_1 = arith.constant 0 : i32
    return %c0_i32, %c0_i32_0 : i32, i32
  }
  func.func @transform_2(%arg0: i32) -> (i32, i32) {
    %c0_i32 = arith.constant 0 : i32
    %c0_i32_0 = arith.constant 0 : i32
    %c0_i32_1 = arith.constant 0 : i32
    return %c0_i32, %c0_i32_0 : i32, i32
  }
  func.func @transform_3(%arg0: i32) -> (i32, i32, i32) {
    %c0_i32 = arith.constant 0 : i32
    %c0_i32_0 = arith.constant 0 : i32
    %c0_i32_1 = arith.constant 0 : i32
    return %arg0, %c0_i32, %c0_i32_0 : i32, i32, i32
  }
}

</mosaic_0001>

<llo_original>
// kernel: segformer_wrapper_forward.2
$region0: #{segformer_wrapper_forward.2}
  #allocation0 [shape = 'u32[]', space=smem, size = 0x4, offset = 0x4, fixed_abs, tag = 'smem constant byte address 0x4 - core index']
  #allocation1 [shape = 'u32[144,128]{1,0:T(1,128)}', space=vmem, size = 0x12000, scoped, tag = 'internal scratch']
  %s0 = inlined_call_operand.vmem [shape: f32[2,64,256], index: 0, kind: input, shape index: {}]
  %s1 = inlined_call_operand.vmem [shape: f32[8,64], index: 1, kind: input, shape index: {}]
  %s2 = inlined_call_operand.vmem [shape: f32[8,1], index: 2, kind: input, shape index: {}]
  %s3 = inlined_call_operand.vmem [shape: f32[2,8,256], index: 3, kind: output, shape index: {}]
  %s4 = sld [smem:[#allocation0]]
  $region83: #{segformer_wrapper_forward.2} parent=0
    _
  %s6 = ssub.s32 1, %s4
  %s7 = scalar_select 0, %s6, %s4
  $region1: #{segformer_wrapper_forward.2} parent=0
    #allocation2 [shape = 'u8[65536]{0}', space=vmem, size = 0x10000, scoped, tag = 'input window, operand 0']
    loop: start=0, step=1, limit=6
    $region2: #{segformer_wrapper_forward.2} parent=1 // loop_pre_header
      _
    $region3: #{segformer_wrapper_forward.2} parent=1 // loop_header
      %s9 = sphi 0, %s13
      %p10 = scmp.ge.s32.totalorder %s9, 6
      %s16 = sphi 0, %s28
      %s17 = sphi 0, %s24
      %s18 = sphi 0, %s16
      %s19 = sphi 0, %s17
      %s20 = sphi 0, %s18
      %s21 = sphi 0, %s19
      %s33 = sphi 0, %s35
      %s36 = sphi 0, %s33
      %s37 = sphi 0, %s36
      %s53 = sphi 0, %s37
      %s57 = sphi 0, %s57
      %s59 = sphi 0, %s57
      %s60 = sphi 0, %s59
      %s74 = sphi 0, %s60
      %s78 = sphi 0, %s78
      %s80 = sphi 0, %s78
      %s81 = sphi 0, %s80
      %s95 = sphi 0, %s81
      %s103 = sphi 0, %s105
      %s106 = sphi 0, %s103
      %s107 = sphi 0, %s106
      %s123 = sphi 0, %s107
    $region4: #{segformer_wrapper_forward.2} parent=1 // loop_header_branch
      %12 = sbr.rel (%p10) target = $region8
    $region5: #{segformer_wrapper_forward.2} parent=1 // loop_body
      %s14 = ssub.s32 %s9, 1
      %s15 = ssub.s32 %s9, 2
      %s22 = sadd.s32 1, %s17
      %p23 = scmp.ge.s32.totalorder %s22, 2
      %s24 = scalar_select %p23, 0, %s22
      %s25 = sadd.s32 1, %s16
      %s26 = scalar_select %p23, %s25, %s16
      %p27 = scmp.ge.s32.totalorder %s26, 2
      %s28 = scalar_select %p27, 0, %s26
      %s29 = ssub.s32 %s16, %s28
      %s30 = ssub.s32 %s17, %s24
      %s31 = sor.u32 %s29, %s30
      %p32 = scmp.eq.s32.totalorder %s31, 0
      %s34 = sadd.s32 %s33, 1
      %s35 = scalar_select %p32, %s33, %s34
      %p38 = pneg %p32
      %p39 = scmp.eq.s32.totalorder %s9, 3
      %p40 = por %p38, %p39
      %p41 = scmp.ne.s32.totalorder %s33, %s36
      %p42 = scmp.eq.s32.totalorder %s9, 0
      %p43 = por %p41, %p42
      %p44 = scmp.ne.s32.totalorder %s33, %s36
      %p45 = scmp.eq.s32.totalorder %s14, 3
      %p46 = por %p44, %p45
      %p47 = scmp.ne.s32.totalorder %s36, %s37
      %p48 = scmp.eq.s32.totalorder %s14, 0
      %p49 = por %p47, %p48
      %p50 = scmp.ne.s32.totalorder %s36, %s37
      %p51 = scmp.eq.s32.totalorder %s15, 3
      %p52 = por %p50, %p51
      %p54 = scmp.ne.s32.totalorder %s37, %s53
      %p55 = scmp.eq.s32.totalorder %s15, 0
      %p56 = por %p54, %p55
      %s58 = sadd.s32 %s57, 1
      %p61 = scmp.eq.s32.totalorder %s9, 3
      %p62 = scmp.ne.s32.totalorder %s57, %s59
      %p63 = scmp.eq.s32.totalorder %s9, 0
      %p64 = por %p62, %p63
      %p65 = scmp.ne.s32.totalorder %s57, %s59
      %p66 = scmp.eq.s32.totalorder %s14, 3
      %p67 = por %p65, %p66
      %p68 = scmp.ne.s32.totalorder %s59, %s60
      %p69 = scmp.eq.s32.totalorder %s14, 0
      %p70 = por %p68, %p69
      %p71 = scmp.ne.s32.totalorder %s59, %s60
      %p72 = scmp.eq.s32.totalorder %s15, 3
      %p73 = por %p71, %p72
      %p75 = scmp.ne.s32.totalorder %s60, %s74
      %p76 = scmp.eq.s32.totalorder %s15, 0
      %p77 = por %p75, %p76
      %s79 = sadd.s32 %s78, 1
      %p82 = scmp.eq.s32.totalorder %s9, 3
      %p83 = scmp.ne.s32.totalorder %s78, %s80
      %p84 = scmp.eq.s32.totalorder %s9, 0
      %p85 = por %p83, %p84
      %p86 = scmp.ne.s32.totalorder %s78, %s80
      %p87 = scmp.eq.s32.totalorder %s14, 3
      %p88 = por %p86, %p87
      %p89 = scmp.ne.s32.totalorder %s80, %s81
      %p90 = scmp.eq.s32.totalorder %s14, 0
      %p91 = por %p89, %p90
      %p92 = scmp.ne.s32.totalorder %s80, %s81
      %p93 = scmp.eq.s32.totalorder %s15, 3
      %p94 = por %p92, %p93
      %p96 = scmp.ne.s32.totalorder %s81, %s95
      %p97 = scmp.eq.s32.totalorder %s15, 0
      %p98 = por %p96, %p97
      %s99 = ssub.s32 %s16, %s28
      %s100 = ssub.s32 %s17, %s24
      %s101 = sor.u32 %s99, %s100
      %p102 = scmp.eq.s32.totalorder %s101, 0
      %s104 = sadd.s32 %s103, 1
      %s105 = scalar_select %p102, %s103, %s104
      %p108 = pneg %p102
      %p109 = scmp.eq.s32.totalorder %s9, 3
      %p110 = por %p108, %p109
      %p111 = scmp.ne.s32.totalorder %s103, %s106
      %p112 = scmp.eq.s32.totalorder %s9, 0
      %p113 = por %p111, %p112
      %p114 = scmp.ne.s32.totalorder %s103, %s106
      %p115 = scmp.eq.s32.totalorder %s14, 3
      %p116 = por %p114, %p115
      %p117 = scmp.ne.s32.totalorder %s106, %s107
      %p118 = scmp.eq.s32.totalorder %s14, 0
      %p119 = por %p117, %p118
      %p120 = scmp.ne.s32.totalorder %s106, %s107
      %p121 = scmp.eq.s32.totalorder %s15, 3
      %p122 = por %p120, %p121
      %p124 = scmp.ne.s32.totalorder %s107, %s123
      %p125 = scmp.eq.s32.totalorder %s15, 0
      %p126 = por %p124, %p125
      %p127 = scmp.le.s32.totalorder 1, %s9
      %p128 = scmp.lt.s32.totalorder %s9, 5
      %p129 = pnand %p127, %p128
      %p130 = pneg %p129
      // Predicated region
      $region9: #{segformer_wrapper_forward.2} parent=5 // pred_check
        _
      $region10: #{segformer_wrapper_forward.2} parent=5 // pred_check_branch
        %132 = sbr.rel (%p129) target = $region12
      $region11: #{segformer_wrapper_forward.2} parent=5 // pred_region
        %s133 = ssub.s32 %s9, 1
        // Predicated region
        $region13: #{segformer_wrapper_forward.2} parent=11 // pred_check
          %p134 = pneg %p70
        $region14: #{segformer_wrapper_forward.2} parent=11 // pred_check_branch
          %136 = sbr.rel (%p134) target = $region16
        $region15: #{segformer_wrapper_forward.2} parent=11 // pred_region
          _
        $region16: #{segformer_wrapper_forward.2} parent=11 // pred_fallthru
          _
        // Predicated region
        $region17: #{segformer_wrapper_forward.2} parent=11 // pred_check
          %p137 = pneg %p91
        $region18: #{segformer_wrapper_forward.2} parent=11 // pred_check_branch
          %139 = sbr.rel (%p137) target = $region20
        $region19: #{segformer_wrapper_forward.2} parent=11 // pred_region
          _
        $region20: #{segformer_wrapper_forward.2} parent=11 // pred_fallthru
          _
      $region12: #{segformer_wrapper_forward.2} parent=5 // pred_fallthru
        _
      %p140 = scmp.lt.s32.totalorder %s9, 4
      // Predicated region
      $region21: #{segformer_wrapper_forward.2} parent=5 // pred_check
        %p141 = pneg %p140
      $region22: #{segformer_wrapper_forward.2} parent=5 // pred_check_branch
        %143 = sbr.rel (%p141) target = $region24
      $region23: #{segformer_wrapper_forward.2} parent=5 // pred_region
        // Predicated region
        $region25: #{segformer_wrapper_forward.2} parent=23 // pred_check
          %p144 = pneg %p43
        $region26: #{segformer_wrapper_forward.2} parent=23 // pred_check_branch
          %146 = sbr.rel (%p144) target = $region28
        $region27: #{segformer_wrapper_forward.2} parent=23 // pred_region
          %s147 = sand.u32 %s33, 1
          %s148 = sand.u32 %s33, 1
          %s149 = smul.addr %s148, 64
          %s150 = scalar_lea.vmem [#allocation2], %s149
          %s151 = smul.addr %s16, 16
          %s152 = sadd.s32 %s17, %s151
          %s153 = smul.addr %s152, 8
          %s154 = scalar_lea.vmem %s0, %s153
          // Predicated region
          $region29: #{segformer_wrapper_forward.2} parent=27 // pred_check
            _
          $region30: #{segformer_wrapper_forward.2} parent=27 // pred_check_branch
            %156 = sbr.rel (0) target = $region32
          $region31: #{segformer_wrapper_forward.2} parent=27 // pred_region
            // Predicated region
            $region33: #{segformer_wrapper_forward.2} parent=31 // pred_check
              _
            $region34: #{segformer_wrapper_forward.2} parent=31 // pred_check_branch
              %158 = sbr.rel (0) target = $region36
            $region35: #{segformer_wrapper_forward.2} parent=31 // pred_region
              // Predicated region
              $region48: #{segformer_wrapper_forward.2} parent=35 // pred_check
                _
              $region49: #{segformer_wrapper_forward.2} parent=35 // pred_check_branch
                %188 = sbr.rel (0) target = $region51
              $region50: #{segformer_wrapper_forward.2} parent=35 // pred_region
                loop: start=0, step=1, limit=1
                $region52: #{segformer_wrapper_forward.2} parent=50 // loop_pre_header
                  _
                $region53: #{segformer_wrapper_forward.2} parent=50 // loop_header
                  %s190 = sphi 0, %s194
                  %p191 = scmp.ge.s32.totalorder %s190, 1
                  %s195 = sphi %s154, %s154
                  %s196 = sphi %s150, %s150
                $region54: #{segformer_wrapper_forward.2} parent=50 // loop_header_branch
                  %193 = sbr.rel (%p191) target = $region58
                $region55: #{segformer_wrapper_forward.2} parent=50 // loop_body
                  %v197 = vld [vmem:[%s195] sm:$0xff]
                  %198 = vst [vmem:[%s196] sm:$0xff] %v197
                  %v199 = vld [vmem:[%s195 + $0x10] sm:$0xff]
                  %200 = vst [vmem:[%s196 + $0x8] sm:$0xff] %v199
                  %v201 = vld [vmem:[%s195 + $0x20] sm:$0xff]
                  %202 = vst [vmem:[%s196 + $0x10] sm:$0xff] %v201
                  %v203 = vld [vmem:[%s195 + $0x30] sm:$0xff]
                  %204 = vst [vmem:[%s196 + $0x18] sm:$0xff] %v203
                  %v205 = vld [vmem:[%s195 + $0x40] sm:$0xff]
                  %206 = vst [vmem:[%s196 + $0x20] sm:$0xff] %v205
                  %v207 = vld [vmem:[%s195 + $0x50] sm:$0xff]
                  %208 = vst [vmem:[%s196 + $0x28] sm:$0xff] %v207
                  %v209 = vld [vmem:[%s195 + $0x60] sm:$0xff]
                  %210 = vst [vmem:[%s196 + $0x30] sm:$0xff] %v209
                  %v211 = vld [vmem:[%s195 + $0x70] sm:$0xff]
                  %212 = vst [vmem:[%s196 + $0x38] sm:$0xff] %v211
                $region56: #{segformer_wrapper_forward.2} parent=50 // loop_footer
                  %s194 = sadd.s32 1, %s190
                $region57: #{segformer_wrapper_forward.2} parent=50 // loop_footer_branch
                  %189 = sbr.rel target = $region53
                $region58: #{segformer_wrapper_forward.2} parent=50 // loop_exit
                  _
              $region51: #{segformer_wrapper_forward.2} parent=35 // pred_fallthru
                _
              // Predicated region
              $region59: #{segformer_wrapper_forward.2} parent=35 // pred_check
                _
              $region60: #{segformer_wrapper_forward.2} parent=35 // pred_check_branch
                %214 = sbr.rel target = $region62
              $region61: #{segformer_wrapper_forward.2} parent=35 // pred_region
                _
              $region62: #{segformer_wrapper_forward.2} parent=35 // pred_fallthru
                _
            $region36: #{segformer_wrapper_forward.2} parent=31 // pred_fallthru
              _
            // Predicated region
            $region37: #{segformer_wrapper_forward.2} parent=31 // pred_check
              _
            $region38: #{segformer_wrapper_forward.2} parent=31 // pred_check_branch
              %160 = sbr.rel target = $region40
            $region39: #{segformer_wrapper_forward.2} parent=31 // pred_region
              %s162 = ssub.s32 256, 1
              loop: start=0, step=1, limit=1
              $region41: #{segformer_wrapper_forward.2} parent=39 // loop_pre_header
                _
              $region42: #{segformer_wrapper_forward.2} parent=39 // loop_header
                %s164 = sphi 0, %s168
                %p165 = scmp.ge.s32.totalorder %s164, 1
                %s169 = sphi %s154, %s154
                %s170 = sphi %s150, %s150
              $region43: #{segformer_wrapper_forward.2} parent=39 // loop_header_branch
                %167 = sbr.rel (%p165) target = $region47
              $region44: #{segformer_wrapper_forward.2} parent=39 // loop_body
                %v171 = vld [vmem:[%s169] sm:%s162]
                %172 = vst [vmem:[%s170] sm:%s162] %v171
                %v173 = vld [vmem:[%s169 + $0x10] sm:%s162]
                %174 = vst [vmem:[%s170 + $0x8] sm:%s162] %v173
                %v175 = vld [vmem:[%s169 + $0x20] sm:%s162]
                %176 = vst [vmem:[%s170 + $0x10] sm:%s162] %v175
                %v177 = vld [vmem:[%s169 + $0x30] sm:%s162]
                %178 = vst [vmem:[%s170 + $0x18] sm:%s162] %v177
                %v179 = vld [vmem:[%s169 + $0x40] sm:%s162]
                %180 = vst [vmem:[%s170 + $0x20] sm:%s162] %v179
                %v181 = vld [vmem:[%s169 + $0x50] sm:%s162]
                %182 = vst [vmem:[%s170 + $0x28] sm:%s162] %v181
                %v183 = vld [vmem:[%s169 + $0x60] sm:%s162]
                %184 = vst [vmem:[%s170 + $0x30] sm:%s162] %v183
                %v185 = vld [vmem:[%s169 + $0x70] sm:%s162]
                %186 = vst [vmem:[%s170 + $0x38] sm:%s162] %v185
              $region45: #{segformer_wrapper_forward.2} parent=39 // loop_footer
                %s168 = sadd.s32 1, %s164
              $region46: #{segformer_wrapper_forward.2} parent=39 // loop_footer_branch
                %163 = sbr.rel target = $region42
              $region47: #{segformer_wrapper_forward.2} parent=39 // loop_exit
                _
            $region40: #{segformer_wrapper_forward.2} parent=31 // pred_fallthru
              _
          $region32: #{segformer_wrapper_forward.2} parent=27 // pred_fallthru
            _
          %215 = vnop
        $region28: #{segformer_wrapper_forward.2} parent=23 // pred_fallthru
          _
      $region24: #{segformer_wrapper_forward.2} parent=5 // pred_fallthru
        _
      %p216 = scmp.le.s32.totalorder 1, %s9
      %p217 = scmp.lt.s32.totalorder %s9, 5
      %p218 = pnand %p216, %p217
      %p219 = pneg %p218
      // Predicated region
      $region63: #{segformer_wrapper_forward.2} parent=5 // pred_check
        _
      $region64: #{segformer_wrapper_forward.2} parent=5 // pred_check_branch
        %221 = sbr.rel (%p218) target = $region66
      $region65: #{segformer_wrapper_forward.2} parent=5 // pred_region
        %s222 = ssub.s32 %s9, 1
        %s223 = sand.u32 %s36, 1
        %s224 = sand.u32 %s36, 1
        %s225 = smul.addr %s224, 64
        %s226 = scalar_lea.vmem [#allocation2], %s225
        // Predicated region
        $region67: #{segformer_wrapper_forward.2} parent=65 // pred_check
          %p227 = pneg %p49
        $region68: #{segformer_wrapper_forward.2} parent=65 // pred_check_branch
          %229 = sbr.rel (%p227) target = $region70
        $region69: #{segformer_wrapper_forward.2} parent=65 // pred_region
          _
        $region70: #{segformer_wrapper_forward.2} parent=65 // pred_fallthru
          _
        %s230 = sand.u32 %s36, 1
        %s231 = sand.u32 %s36, 1
        %s232 = smul.addr %s231, 64
        %s233 = scalar_lea.vmem [#allocation2], %s232
        %p234 = pneg %p49
        %p235 = pneg %p46
        %p236 = pneg %p70
        %p237 = pneg %p67
        %p238 = pneg %p91
        %p239 = pneg %p88
        %p240 = pneg %p119
        %p241 = pneg %p116
        %p242 = scmp.lt.s32.totalorder %s18, 1
        %s243 = scalar_select %p242, %s18, 1
        %p244 = scmp.lt.s32.totalorder %s19, 1
        %s245 = scalar_select %p244, %s19, 1
        %s246 = smul.addr %s243, 2
        %s247 = sadd.s32 %s245, %s246
        %s248 = smul.addr %s247, 8
        %s249 = scalar_lea.vmem %s3, %s248
        %p250 = scmp.lt.s32.totalorder %s18, 1
        %s251 = scalar_select %p250, %s18, 1
        %p252 = scmp.lt.s32.totalorder %s19, 1
        %s253 = scalar_select %p252, %s19, 1
        %s254 = smul.addr %s251, 2
        %s255 = sadd.s32 %s253, %s254
        %s256 = smul.addr %s255, 8
        %s257 = scalar_lea.vmem %s3, %s256
        %v258 = vld [vmem:[%s1] sm:$0xff]
        %v259 = vld [vmem:[%s226] sm:$0xff]
        %v260 = vld [vmem:[%s226 + $0x8] sm:$0xff]
        %v261 = vld [vmem:[%s226 + $0x10] sm:$0xff]
        %v262 = vld [vmem:[%s226 + $0x18] sm:$0xff]
        %v263 = vld [vmem:[%s226 + $0x20] sm:$0xff]
        %v264 = vld [vmem:[%s226 + $0x28] sm:$0xff]
        %v265 = vld [vmem:[%s226 + $0x30] sm:$0xff]
        %v266 = vld [vmem:[%s226 + $0x38] sm:$0xff]
        %v267 = vld [vmem:[%s2] sm:$0xff]
        %269 = vset.pattern.permute.xlu0 0
        %270 = vperm.xlu0 %269, %v267
        %v271 = vpop.permute.xlu0 %270
        %vm273 = vcmask 523264
        %v275 = vsel %vm273, %v258, 0
        %277 = vmatprep.subr.mxu0 0.0
        %278 = vmatpush1.msra.mxu0 0.0
        %279 = vmatprep.subr.mxu0 0.0
        %280 = vmatpush1.msra.mxu0 0.0
        %281 = vmatprep.subr.mxu0 0.0
        %282 = vmatpush1.msra.mxu0 0.0
        %283 = vmatprep.subr.mxu0 0.0
        %284 = vmatpush1.msra.mxu0 0.0
        %285 = vmatprep.subr.mxu0 0.0
        %286 = vmatpush1.msra.mxu0 0.0
        %287 = vmatprep.subr.mxu0 0.0
        %288 = vmatpush1.msra.mxu0 0.0
        %289 = vmatprep.subr.mxu0 0.0
        %290 = vmatpush1.msra.mxu0 0.0
        %291 = vmatprep.subr.mxu0 0.0
        %292 = vmatpush1.msra.mxu0 0.0
        %293 = vmatprep.subr.mxu0 0.0
        %294 = vmatpush1.msra.mxu0 %v266
        %295 = vmatprep.subr.mxu0 0.0
        %296 = vmatpush1.msra.mxu0 %v265
        %297 = vmatprep.subr.mxu0 0.0
        %298 = vmatpush1.msra.mxu0 %v264
        %299 = vmatprep.subr.mxu0 0.0
        %300 = vmatpush1.msra.mxu0 %v263
        %301 = vmatprep.subr.mxu0 0.0
        %302 = vmatpush1.msra.mxu0 %v262
        %303 = vmatprep.subr.mxu0 0.0
        %304 = vmatpush1.msra.mxu0 %v261
        %305 = vmatprep.subr.mxu0 0.0
        %306 = vmatpush1.msra.mxu0 %v260
        %307 = vmatprep.subr.mxu0 0.0
        %308 = vmatpush1.msra.mxu0 %v259
        %309 = vmatprep.subr.mxu0 0.0
        %310 = vmatpush2.msra.mxu0 0.0
        %311 = vmatprep.subr.mxu0 0.0
        %312 = vmatpush2.msra.mxu0 0.0
        %313 = vmatprep.subr.mxu0 0.0
        %314 = vmatpush2.msra.mxu0 0.0
        %315 = vmatprep.subr.mxu0 0.0
        %316 = vmatpush2.msra.mxu0 0.0
        %317 = vmatprep.subr.mxu0 0.0
        %318 = vmatpush2.msra.mxu0 0.0
        %319 = vmatprep.subr.mxu0 0.0
        %320 = vmatpush2.msra.mxu0 0.0
        %321 = vmatprep.subr.mxu0 0.0
        %322 = vmatpush2.msra.mxu0 0.0
        %323 = vmatprep.subr.mxu0 0.0
        %324 = vmatpush2.msra.mxu0 0.0
        %325 = vmatprep.subr.mxu0 0.0
        %326 = vmatpush2.msra.mxu0 0.0
        %327 = vmatprep.subr.mxu0 0.0
        %328 = vmatpush2.msra.mxu0 0.0
        %329 = vmatprep.subr.mxu0 0.0
        %330 = vmatpush2.msra.mxu0 0.0
        %331 = vmatprep.subr.mxu0 0.0
        %332 = vmatpush2.msra.mxu0 0.0
        %333 = vmatprep.subr.mxu0 0.0
        %334 = vmatpush2.msra.mxu0 0.0
        %335 = vmatprep.subr.mxu0 0.0
        %336 = vmatpush2.msra.mxu0 0.0
        %337 = vmatprep.subr.mxu0 0.0
        %338 = vmatpush2.msra.mxu0 0.0
        %339 = vmatprep.subr.mxu0 0.0
        %340 = vmatpush2.msra.mxu0 0.0
        %341 = vmatprep.mubr.f32.mxu0 0.0
        %342 = vmatmul.mubr.f32.gmra.mxu0 %v275
        %v343 = vpop.f32.mrf.mxu0
        %v344 = vadd.f32 %v271, %v343
        %v345 = vpop.f32.mrf.mxu0
        %346 = vdwg.mxu0
        %347 = vst [vmem:[%s257] sm:$0xff] %v344
        %p348 = scmp.lt.s32.totalorder %s18, 1
        %s349 = scalar_select %p348, %s18, 1
        %p350 = scmp.lt.s32.totalorder %s19, 1
        %s351 = scalar_select %p350, %s19, 1
        %s352 = smul.addr %s349, 2
        %s353 = sadd.s32 %s351, %s352
        %s354 = smul.addr %s353, 8
        %s355 = scalar_lea.vmem %s3, %s354
        // Predicated region
        $region71: #{segformer_wrapper_forward.2} parent=65 // pred_check
          %p356 = pneg %p116
        $region72: #{segformer_wrapper_forward.2} parent=65 // pred_check_branch
          %358 = sbr.rel (%p356) target = $region74
        $region73: #{segformer_wrapper_forward.2} parent=65 // pred_region
          _
        $region74: #{segformer_wrapper_forward.2} parent=65 // pred_fallthru
          _
      $region66: #{segformer_wrapper_forward.2} parent=5 // pred_fallthru
        _
      %p359 = scmp.le.s32.totalorder 2, %s9
      // Predicated region
      $region75: #{segformer_wrapper_forward.2} parent=5 // pred_check
        %p360 = pneg %p359
      $region76: #{segformer_wrapper_forward.2} parent=5 // pred_check_branch
        %362 = sbr.rel (%p360) target = $region78
      $region77: #{segformer_wrapper_forward.2} parent=5 // pred_region
        %s363 = ssub.s32 %s9, 2
        // Predicated region
        $region79: #{segformer_wrapper_forward.2} parent=77 // pred_check
          %p364 = pneg %p122
        $region80: #{segformer_wrapper_forward.2} parent=77 // pred_check_branch
          %366 = sbr.rel (%p364) target = $region82
        $region81: #{segformer_wrapper_forward.2} parent=77 // pred_region
          %p367 = scmp.lt.s32.totalorder %s20, 1
          %s368 = scalar_select %p367, %s20, 1
          %p369 = scmp.lt.s32.totalorder %s21, 1
          %s370 = scalar_select %p369, %s21, 1
          %s371 = smul.addr %s368, 2
          %s372 = sadd.s32 %s370, %s371
          %s373 = smul.addr %s372, 8
          %s374 = scalar_lea.vmem %s3, %s373
        $region82: #{segformer_wrapper_forward.2} parent=77 // pred_fallthru
          _
      $region78: #{segformer_wrapper_forward.2} parent=5 // pred_fallthru
        _
    $region6: #{segformer_wrapper_forward.2} parent=1 // loop_footer
      %s13 = sadd.s32 1, %s9
    $region7: #{segformer_wrapper_forward.2} parent=1 // loop_footer_branch
      %8 = sbr.rel target = $region3
    $region8: #{segformer_wrapper_forward.2} parent=1 // loop_exit
      _

// kernel: segformer_wrapper_forward.3
$region0: #{segformer_wrapper_forward.3}
  #allocation0 [shape = 'u32[]', space=smem, size = 0x4, offset = 0x4, fixed_abs, tag = 'smem constant byte address 0x4 - core index']
  #allocation1 [shape = 'u32[144,128]{1,0:T(1,128)}', space=vmem, size = 0x12000, scoped, tag = 'internal scratch']
  %s0 = inlined_call_operand.vmem [shape: f32[256,16], index: 0, kind: input, shape index: {}]
  %s1 = inlined_call_operand.vmem [shape: f32[64,16], index: 1, kind: input, shape index: {}]
  %s2 = inlined_call_operand.vmem [shape: f32[16,64], index: 2, kind: input, shape index: {}]
  %s3 = inlined_call_operand.hbm [shape: f32[16,64,64], index: 3, kind: output, shape index: {}]
  %s4 = sld [smem:[#allocation0]]
  $region45: #{segformer_wrapper_forward.3} parent=0
    _
  %s6 = ssub.s32 1, %s4
  %s7 = scalar_select 0, %s6, %s4
  $region1: #{segformer_wrapper_forward.3} parent=0
    #allocation2 [shape = 'u8[524288]{0}', space=vmem, size = 0x80000, scoped, tag = 'output window, operand 0']
    #allocation3 [shape = 's32[2]{0}', space=sflag, size = 0x8, scoped, tag = 'scoped memory for segformer_wrapper_forward.3']
    %8 = vsyncpa [#allocation3], 0
    %s9 = scalar_lea.sflag [#allocation3], 1
    %10 = vsyncpa %s9, 0
    loop: start=0, step=1, limit=4
    $region2: #{segformer_wrapper_forward.3} parent=1 // loop_pre_header
      _
    $region3: #{segformer_wrapper_forward.3} parent=1 // loop_header
      %s12 = sphi 0, %s16
      %p13 = scmp.ge.s32.totalorder %s12, 4
      %s22 = sphi 0, %s24
      %s25 = sphi 0, %s22
      %s26 = sphi 0, %s25
      %s42 = sphi 0, %s26
      %s46 = sphi 0, %s46
      %s48 = sphi 0, %s46
      %s49 = sphi 0, %s48
      %s63 = sphi 0, %s49
      %s67 = sphi 0, %s67
      %s69 = sphi 0, %s67
      %s70 = sphi 0, %s69
      %s84 = sphi 0, %s70
      %s90 = sphi 0, %s92
      %s93 = sphi 0, %s90
      %s94 = sphi 0, %s93
      %s110 = sphi 0, %s94
    $region4: #{segformer_wrapper_forward.3} parent=1 // loop_header_branch
      %15 = sbr.rel (%p13) target = $region8
    $region5: #{segformer_wrapper_forward.3} parent=1 // loop_body
      %s17 = ssub.s32 %s12, 1
      %s18 = ssub.s32 %s12, 2
      %s19 = sadd.s32 %s12, 1
      %s20 = ssub.s32 %s12, %s19
      %p21 = scmp.eq.s32.totalorder %s20, 0
      %s23 = sadd.s32 %s22, 1
      %s24 = scalar_select %p21, %s22, %s23
      %p27 = pneg %p21
      %p28 = scmp.eq.s32.totalorder %s12, 1
      %p29 = por %p27, %p28
      %p30 = scmp.ne.s32.totalorder %s22, %s25
      %p31 = scmp.eq.s32.totalorder %s12, 0
      %p32 = por %p30, %p31
      %p33 = scmp.ne.s32.totalorder %s22, %s25
      %p34 = scmp.eq.s32.totalorder %s17, 1
      %p35 = por %p33, %p34
      %p36 = scmp.ne.s32.totalorder %s25, %s26
      %p37 = scmp.eq.s32.totalorder %s17, 0
      %p38 = por %p36, %p37
      %p39 = scmp.ne.s32.totalorder %s25, %s26
      %p40 = scmp.eq.s32.totalorder %s18, 1
      %p41 = por %p39, %p40
      %p43 = scmp.ne.s32.totalorder %s26, %s42
      %p44 = scmp.eq.s32.totalorder %s18, 0
      %p45 = por %p43, %p44
      %s47 = sadd.s32 %s46, 1
      %p50 = scmp.eq.s32.totalorder %s12, 1
      %p51 = scmp.ne.s32.totalorder %s46, %s48
      %p52 = scmp.eq.s32.totalorder %s12, 0
      %p53 = por %p51, %p52
      %p54 = scmp.ne.s32.totalorder %s46, %s48
      %p55 = scmp.eq.s32.totalorder %s17, 1
      %p56 = por %p54, %p55
      %p57 = scmp.ne.s32.totalorder %s48, %s49
      %p58 = scmp.eq.s32.totalorder %s17, 0
      %p59 = por %p57, %p58
      %p60 = scmp.ne.s32.totalorder %s48, %s49
      %p61 = scmp.eq.s32.totalorder %s18, 1
      %p62 = por %p60, %p61
      %p64 = scmp.ne.s32.totalorder %s49, %s63
      %p65 = scmp.eq.s32.totalorder %s18, 0
      %p66 = por %p64, %p65
      %s68 = sadd.s32 %s67, 1
      %p71 = scmp.eq.s32.totalorder %s12, 1
      %p72 = scmp.ne.s32.totalorder %s67, %s69
      %p73 = scmp.eq.s32.totalorder %s12, 0
      %p74 = por %p72, %p73
      %p75 = scmp.ne.s32.totalorder %s67, %s69
      %p76 = scmp.eq.s32.totalorder %s17, 1
      %p77 = por %p75, %p76
      %p78 = scmp.ne.s32.totalorder %s69, %s70
      %p79 = scmp.eq.s32.totalorder %s17, 0
      %p80 = por %p78, %p79
      %p81 = scmp.ne.s32.totalorder %s69, %s70
      %p82 = scmp.eq.s32.totalorder %s18, 1
      %p83 = por %p81, %p82
      %p85 = scmp.ne.s32.totalorder %s70, %s84
      %p86 = scmp.eq.s32.totalorder %s18, 0
      %p87 = por %p85, %p86
      %s88 = ssub.s32 %s12, %s19
      %p89 = scmp.eq.s32.totalorder %s88, 0
      %s91 = sadd.s32 %s90, 1
      %s92 = scalar_select %p89, %s90, %s91
      %p95 = pneg %p89
      %p96 = scmp.eq.s32.totalorder %s12, 1
      %p97 = por %p95, %p96
      %p98 = scmp.ne.s32.totalorder %s90, %s93
      %p99 = scmp.eq.s32.totalorder %s12, 0
      %p100 = por %p98, %p99
      %p101 = scmp.ne.s32.totalorder %s90, %s93
      %p102 = scmp.eq.s32.totalorder %s17, 1
      %p103 = por %p101, %p102
      %p104 = scmp.ne.s32.totalorder %s93, %s94
      %p105 = scmp.eq.s32.totalorder %s17, 0
      %p106 = por %p104, %p105
      %p107 = scmp.ne.s32.totalorder %s93, %s94
      %p108 = scmp.eq.s32.totalorder %s18, 1
      %p109 = por %p107, %p108
      %p111 = scmp.ne.s32.totalorder %s94, %s110
      %p112 = scmp.eq.s32.totalorder %s18, 0
      %p113 = por %p111, %p112
      %p114 = scmp.le.s32.totalorder 1, %s12
      %p115 = scmp.lt.s32.totalorder %s12, 3
      %p116 = pnand %p114, %p115
      %p117 = pneg %p116
      // Predicated region
      $region9: #{segformer_wrapper_forward.3} parent=5 // pred_check
        _
      $region10: #{segformer_wrapper_forward.3} parent=5 // pred_check_branch
        %119 = sbr.rel (%p116) target = $region12
      $region11: #{segformer_wrapper_forward.3} parent=5 // pred_region
        %s120 = ssub.s32 %s12, 1
        // Predicated region
        $region13: #{segformer_wrapper_forward.3} parent=11 // pred_check
          %p121 = pneg %p59
        $region14: #{segformer_wrapper_forward.3} parent=11 // pred_check_branch
          %123 = sbr.rel (%p121) target = $region16
        $region15: #{segformer_wrapper_forward.3} parent=11 // pred_region
          _
        $region16: #{segformer_wrapper_forward.3} parent=11 // pred_fallthru
          _
        // Predicated region
        $region17: #{segformer_wrapper_forward.3} parent=11 // pred_check
          %p124 = pneg %p80
        $region18: #{segformer_wrapper_forward.3} parent=11 // pred_check_branch
          %126 = sbr.rel (%p124) target = $region20
        $region19: #{segformer_wrapper_forward.3} parent=11 // pred_region
          _
        $region20: #{segformer_wrapper_forward.3} parent=11 // pred_fallthru
          _
      $region12: #{segformer_wrapper_forward.3} parent=5 // pred_fallthru
        _
      %p127 = scmp.lt.s32.totalorder %s12, 2
      // Predicated region
      $region21: #{segformer_wrapper_forward.3} parent=5 // pred_check
        %p128 = pneg %p127
      $region22: #{segformer_wrapper_forward.3} parent=5 // pred_check_branch
        %130 = sbr.rel (%p128) target = $region24
      $region23: #{segformer_wrapper_forward.3} parent=5 // pred_region
        // Predicated region
        $region25: #{segformer_wrapper_forward.3} parent=23 // pred_check
          %p131 = pneg %p32
        $region26: #{segformer_wrapper_forward.3} parent=23 // pred_check_branch
          %133 = sbr.rel (%p131) target = $region28
        $region27: #{segformer_wrapper_forward.3} parent=23 // pred_region
          %s134 = smul.u32 16, %s12
          %p135 = scmp.lt.s32.totalorder %s134, 31
          %s136 = scalar_select %p135, %s134, 31
          %s137 = smul.addr %s136, 8
          %s138 = scalar_lea.vmem %s0, %s137
          %s139 = smul.u32 16, %s12
        $region28: #{segformer_wrapper_forward.3} parent=23 // pred_fallthru
          _
      $region24: #{segformer_wrapper_forward.3} parent=5 // pred_fallthru
        _
      %p140 = scmp.le.s32.totalorder 1, %s12
      %p141 = scmp.lt.s32.totalorder %s12, 3
      %p142 = pnand %p140, %p141
      %p143 = pneg %p142
      // Predicated region
      $region29: #{segformer_wrapper_forward.3} parent=5 // pred_check
        _
      $region30: #{segformer_wrapper_forward.3} parent=5 // pred_check_branch
        %145 = sbr.rel (%p142) target = $region32
      $region31: #{segformer_wrapper_forward.3} parent=5 // pred_region
        %s146 = ssub.s32 %s12, 1
        %s147 = smul.u32 16, %s17
        %p148 = scmp.lt.s32.totalorder %s147, 31
        %s149 = scalar_select %p148, %s147, 31
        %s150 = smul.addr %s149, 8
        %s151 = scalar_lea.vmem %s0, %s150
        %p152 = pneg %p38
        %p153 = pneg %p35
        %p154 = pneg %p59
        %p155 = pneg %p56
        %p156 = pneg %p80
        %p157 = pneg %p77
        %p158 = pneg %p106
        %p159 = pneg %p103
        %s160 = sand.u32 %s93, 1
        %s161 = scalar_lea.sflag [#allocation3], %s160
        %s162 = sand.u32 %s93, 1
        %s163 = smul.addr %s162, 512
        %s164 = scalar_lea.vmem [#allocation2], %s163
        %s165 = smul.u32 16, %s17
        %p166 = scmp.lt.s32.totalorder %s165, 31
        %s167 = scalar_select %p166, %s165, 31
        %s168 = smul.addr %s167, 8
        %s169 = scalar_lea.vmem %s0, %s168
        %s170 = smul.u32 16, %s17
        %s171 = smul.u32 8, %s17
        %v172 = vld [vmem:[%s169] sm:$0xff]
        %v173 = vld [vmem:[%s169 + $0x8] sm:$0xff]
        %v174 = vld [vmem:[%s169 + $0x10] sm:$0xff]
        %v175 = vld [vmem:[%s169 + $0x18] sm:$0xff]
        %v176 = vld [vmem:[%s169 + $0x20] sm:$0xff]
        %v177 = vld [vmem:[%s169 + $0x28] sm:$0xff]
        %v178 = vld [vmem:[%s169 + $0x30] sm:$0xff]
        %v179 = vld [vmem:[%s169 + $0x38] sm:$0xff]
        %v180 = vld [vmem:[%s169 + $0x40] sm:$0xff]
        %v181 = vld [vmem:[%s169 + $0x48] sm:$0xff]
        %v182 = vld [vmem:[%s169 + $0x50] sm:$0xff]
        %v183 = vld [vmem:[%s169 + $0x58] sm:$0xff]
        %v184 = vld [vmem:[%s169 + $0x60] sm:$0xff]
        %v185 = vld [vmem:[%s169 + $0x68] sm:$0xff]
        %v186 = vld [vmem:[%s169 + $0x70] sm:$0xff]
        %v187 = vld [vmem:[%s169 + $0x78] sm:$0xff]
        %v188 = vld [vmem:[%s2] sm:$0xff]
        %v189 = vld [vmem:[%s2 + $0x8] sm:$0xff]
        %vm190 = vcmask 130048
        %v192 = vsel %vm190, %v172, 0
        %v195 = vsel %vm190, %v173, 0
        %v198 = vsel %vm190, %v174, 0
        %v201 = vsel %vm190, %v175, 0
        %v204 = vsel %vm190, %v176, 0
        %v207 = vsel %vm190, %v177, 0
        %v210 = vsel %vm190, %v178, 0
        %v213 = vsel %vm190, %v179, 0
        %v216 = vsel %vm190, %v180, 0
        %v219 = vsel %vm190, %v181, 0
        %v222 = vsel %vm190, %v182, 0
        %v225 = vsel %vm190, %v183, 0
        %v228 = vsel %vm190, %v184, 0
        %v231 = vsel %vm190, %v185, 0
        %v234 = vsel %vm190, %v186, 0
        %v237 = vsel %vm190, %v187, 0
        %239 = vmatprep.subr.mxu0 0.0
        %240 = vmatpush1.msra.mxu0 0.0
        %241 = vmatprep.subr.mxu0 0.0
        %242 = vmatpush1.msra.mxu0 0.0
        %243 = vmatprep.subr.mxu0 0.0
        %244 = vmatpush1.msra.mxu0 0.0
        %245 = vmatprep.subr.mxu0 0.0
        %246 = vmatpush1.msra.mxu0 0.0
        %247 = vmatprep.subr.mxu0 0.0
        %248 = vmatpush1.msra.mxu0 0.0
        %249 = vmatprep.subr.mxu0 0.0
        %250 = vmatpush1.msra.mxu0 0.0
        %251 = vmatprep.subr.mxu0 0.0
        %252 = vmatpush1.msra.mxu0 0.0
        %253 = vmatprep.subr.mxu0 0.0
        %254 = vmatpush1.msra.mxu0 0.0
        %255 = vmatprep.subr.mxu0 0.0
        %256 = vmatpush1.msra.mxu0 0.0
        %257 = vmatprep.subr.mxu0 0.0
        %258 = vmatpush1.msra.mxu0 0.0
        %259 = vmatprep.subr.mxu0 0.0
        %260 = vmatpush1.msra.mxu0 0.0
        %261 = vmatprep.subr.mxu0 0.0
        %262 = vmatpush1.msra.mxu0 0.0
        %263 = vmatprep.subr.mxu0 0.0
        %264 = vmatpush1.msra.mxu0 0.0
        %265 = vmatprep.subr.mxu0 0.0
        %266 = vmatpush1.msra.mxu0 0.0
        %267 = vmatprep.subr.mxu0 0.0
        %268 = vmatpush1.msra.mxu0 %v189
        %269 = vmatprep.subr.mxu0 0.0
        %270 = vmatpush1.msra.mxu0 %v188
        %271 = vmatprep.subr.mxu0 0.0
        %272 = vmatpush2.msra.mxu0 0.0
        %273 = vmatprep.subr.mxu0 0.0
        %274 = vmatpush2.msra.mxu0 0.0
        %275 = vmatprep.subr.mxu0 0.0
        %276 = vmatpush2.msra.mxu0 0.0
        %277 = vmatprep.subr.mxu0 0.0
        %278 = vmatpush2.msra.mxu0 0.0
        %279 = vmatprep.subr.mxu0 0.0
        %280 = vmatpush2.msra.mxu0 0.0
        %281 = vmatprep.subr.mxu0 0.0
        %282 = vmatpush2.msra.mxu0 0.0
        %283 = vmatprep.subr.mxu0 0.0
        %284 = vmatpush2.msra.mxu0 0.0
        %285 = vmatprep.subr.mxu0 0.0
        %286 = vmatpush2.msra.mxu0 0.0
        %287 = vmatprep.subr.mxu0 0.0
        %288 = vmatpush2.msra.mxu0 0.0
        %289 = vmatprep.subr.mxu0 0.0
        %290 = vmatpush2.msra.mxu0 0.0
        %291 = vmatprep.subr.mxu0 0.0
        %292 = vmatpush2.msra.mxu0 0.0
        %293 = vmatprep.subr.mxu0 0.0
        %294 = vmatpush2.msra.mxu0 0.0
        %295 = vmatprep.subr.mxu0 0.0
        %296 = vmatpush2.msra.mxu0 0.0
        %297 = vmatprep.subr.mxu0 0.0
        %298 = vmatpush2.msra.mxu0 0.0
        %299 = vmatprep.subr.mxu0 0.0
        %300 = vmatpush2.msra.mxu0 0.0
        %301 = vmatprep.subr.mxu0 0.0
        %302 = vmatpush2.msra.mxu0 0.0
        %303 = vmatprep.mubr.f32.mxu0 0.0
        %304 = vmatmul.mubr.f32.gmra.mxu0 %v192
        %v305 = vpop.f32.mrf.mxu0
        %v306 = vadd.f32 0.0, %v305
        %v307 = vpop.f32.mrf.mxu0
        %308 = vmatprep.mubr.f32.mxu0 0.0
        %309 = vmatmul.mubr.f32.gmra.mxu0 %v195
        %v310 = vpop.f32.mrf.mxu0
        %v311 = vadd.f32 0.0, %v310
        %v312 = vpop.f32.mrf.mxu0
        %313 = vmatprep.mubr.f32.mxu0 0.0
        %314 = vmatmul.mubr.f32.gmra.mxu0 %v198
        %v315 = vpop.f32.mrf.mxu0
        %v316 = vadd.f32 0.0, %v315
        %v317 = vpop.f32.mrf.mxu0
        %318 = vmatprep.mubr.f32.mxu0 0.0
        %319 = vmatmul.mubr.f32.gmra.mxu0 %v201
        %v320 = vpop.f32.mrf.mxu0
        %v321 = vadd.f32 0.0, %v320
        %v322 = vpop.f32.mrf.mxu0
        %323 = vmatprep.mubr.f32.mxu0 0.0
        %324 = vmatmul.mubr.f32.gmra.mxu0 %v204
        %v325 = vpop.f32.mrf.mxu0
        %v326 = vadd.f32 0.0, %v325
        %v327 = vpop.f32.mrf.mxu0
        %328 = vmatprep.mubr.f32.mxu0 0.0
        %329 = vmatmul.mubr.f32.gmra.mxu0 %v207
        %v330 = vpop.f32.mrf.mxu0
        %v331 = vadd.f32 0.0, %v330
        %v332 = vpop.f32.mrf.mxu0
        %333 = vmatprep.mubr.f32.mxu0 0.0
        %334 = vmatmul.mubr.f32.gmra.mxu0 %v210
        %v335 = vpop.f32.mrf.mxu0
        %v336 = vadd.f32 0.0, %v335
        %v337 = vpop.f32.mrf.mxu0
        %338 = vmatprep.mubr.f32.mxu0 0.0
        %339 = vmatmul.mubr.f32.gmra.mxu0 %v213
        %v340 = vpop.f32.mrf.mxu0
        %v341 = vadd.f32 0.0, %v340
        %v342 = vpop.f32.mrf.mxu0
        %343 = vmatprep.mubr.f32.mxu0 0.0
        %344 = vmatmul.mubr.f32.gmra.mxu0 %v216
        %v345 = vpop.f32.mrf.mxu0
        %v346 = vadd.f32 0.0, %v345
        %v347 = vpop.f32.mrf.mxu0
        %348 = vmatprep.mubr.f32.mxu0 0.0
        %349 = vmatmul.mubr.f32.gmra.mxu0 %v219
        %v350 = vpop.f32.mrf.mxu0
        %v351 = vadd.f32 0.0, %v350
        %v352 = vpop.f32.mrf.mxu0
        %353 = vmatprep.mubr.f32.mxu0 0.0
        %354 = vmatmul.mubr.f32.gmra.mxu0 %v222
        %v355 = vpop.f32.mrf.mxu0
        %v356 = vadd.f32 0.0, %v355
        %v357 = vpop.f32.mrf.mxu0
        %358 = vmatprep.mubr.f32.mxu0 0.0
        %359 = vmatmul.mubr.f32.gmra.mxu0 %v225
        %v360 = vpop.f32.mrf.mxu0
        %v361 = vadd.f32 0.0, %v360
        %v362 = vpop.f32.mrf.mxu0
        %363 = vmatprep.mubr.f32.mxu0 0.0
        %364 = vmatmul.mubr.f32.gmra.mxu0 %v228
        %v365 = vpop.f32.mrf.mxu0
        %v366 = vadd.f32 0.0, %v365
        %v367 = vpop.f32.mrf.mxu0
        %368 = vmatprep.mubr.f32.mxu0 0.0
        %369 = vmatmul.mubr.f32.gmra.mxu0 %v231
        %v370 = vpop.f32.mrf.mxu0
        %v371 = vadd.f32 0.0, %v370
        %v372 = vpop.f32.mrf.mxu0
        %373 = vmatprep.mubr.f32.mxu0 0.0
        %374 = vmatmul.mubr.f32.gmra.mxu0 %v234
        %v375 = vpop.f32.mrf.mxu0
        %v376 = vadd.f32 0.0, %v375
        %v377 = vpop.f32.mrf.mxu0
        %378 = vmatprep.mubr.f32.mxu0 0.0
        %379 = vmatmul.mubr.f32.gmra.mxu0 %v237
        %v380 = vpop.f32.mrf.mxu0
        %v381 = vadd.f32 0.0, %v380
        %v382 = vpop.f32.mrf.mxu0
        %383 = vdwg.mxu0
        %v384 = vld [vmem:[%s1] sm:$0xff]
        %v385 = vld [vmem:[%s1 + $0x8] sm:$0xff]
        %v386 = vld [vmem:[%s1 + $0x10] sm:$0xff]
        %v387 = vld [vmem:[%s1 + $0x18] sm:$0xff]
        %v388 = vld [vmem:[%s1 + $0x20] sm:$0xff]
        %v389 = vld [vmem:[%s1 + $0x28] sm:$0xff]
        %v390 = vld [vmem:[%s1 + $0x30] sm:$0xff]
        %v391 = vld [vmem:[%s1 + $0x38] sm:$0xff]
        %v393 = vsel %vm190, %v384, 0
        %v396 = vsel %vm190, %v385, 0
        %v399 = vsel %vm190, %v386, 0
        %v402 = vsel %vm190, %v387, 0
        %v405 = vsel %vm190, %v388, 0
        %v408 = vsel %vm190, %v389, 0
        %v411 = vsel %vm190, %v390, 0
        %v414 = vsel %vm190, %v391, 0
        %416 = vmatprep.subr.mxu0 0.0
        %417 = vmatpush1.msra.mxu0 0.0
        %418 = vmatprep.subr.mxu0 0.0
        %419 = vmatpush1.msra.mxu0 0.0
        %420 = vmatprep.subr.mxu0 0.0
        %421 = vmatpush1.msra.mxu0 0.0
        %422 = vmatprep.subr.mxu0 0.0
        %423 = vmatpush1.msra.mxu0 0.0
        %424 = vmatprep.subr.mxu0 0.0
        %425 = vmatpush1.msra.mxu0 0.0
        %426 = vmatprep.subr.mxu0 0.0
        %427 = vmatpush1.msra.mxu0 0.0
        %428 = vmatprep.subr.mxu0 0.0
        %429 = vmatpush1.msra.mxu0 0.0
        %430 = vmatprep.subr.mxu0 0.0
        %431 = vmatpush1.msra.mxu0 0.0
        %432 = vmatprep.subr.mxu0 0.0
        %433 = vmatpush1.msra.mxu0 0.0
        %434 = vmatprep.subr.mxu0 0.0
        %435 = vmatpush1.msra.mxu0 0.0
        %436 = vmatprep.subr.mxu0 0.0
        %437 = vmatpush1.msra.mxu0 0.0
        %438 = vmatprep.subr.mxu0 0.0
        %439 = vmatpush1.msra.mxu0 0.0
        %440 = vmatprep.subr.mxu0 0.0
        %441 = vmatpush1.msra.mxu0 0.0
        %442 = vmatprep.subr.mxu0 0.0
        %443 = vmatpush1.msra.mxu0 0.0
        %444 = vmatprep.subr.mxu0 0.0
        %445 = vmatpush1.msra.mxu0 %v311
        %446 = vmatprep.subr.mxu0 0.0
        %447 = vmatpush1.msra.mxu0 %v306
        %448 = vmatprep.subr.mxu0 0.0
        %449 = vmatpush2.msra.mxu0 0.0
        %450 = vmatprep.subr.mxu0 0.0
        %451 = vmatpush2.msra.mxu0 0.0
        %452 = vmatprep.subr.mxu0 0.0
        %453 = vmatpush2.msra.mxu0 0.0
        %454 = vmatprep.subr.mxu0 0.0
        %455 = vmatpush2.msra.mxu0 0.0
        %456 = vmatprep.subr.mxu0 0.0
        %457 = vmatpush2.msra.mxu0 0.0
        %458 = vmatprep.subr.mxu0 0.0
        %459 = vmatpush2.msra.mxu0 0.0
        %460 = vmatprep.subr.mxu0 0.0
        %461 = vmatpush2.msra.mxu0 0.0
        %462 = vmatprep.subr.mxu0 0.0
        %463 = vmatpush2.msra.mxu0 0.0
        %464 = vmatprep.subr.mxu0 0.0
        %465 = vmatpush2.msra.mxu0 0.0
        %466 = vmatprep.subr.mxu0 0.0
        %467 = vmatpush2.msra.mxu0 0.0
        %468 = vmatprep.subr.mxu0 0.0
        %469 = vmatpush2.msra.mxu0 0.0
        %470 = vmatprep.subr.mxu0 0.0
        %471 = vmatpush2.msra.mxu0 0.0
        %472 = vmatprep.subr.mxu0 0.0
        %473 = vmatpush2.msra.mxu0 0.0
        %474 = vmatprep.subr.mxu0 0.0
        %475 = vmatpush2.msra.mxu0 0.0
        %476 = vmatprep.subr.mxu0 0.0
        %477 = vmatpush2.msra.mxu0 0.0
        %478 = vmatprep.subr.mxu0 0.0
        %479 = vmatpush2.msra.mxu0 0.0
        %480 = vmatprep.mubr.f32.mxu0 0.0
        %481 = vmatmul.mubr.f32.gmra.mxu0 %v393
        %v482 = vpop.f32.mrf.mxu0
        %v483 = vadd.f32 0.0, %v482
        %v484 = vpop.f32.mrf.mxu0
        %485 = vmatprep.mubr.f32.mxu0 0.0
        %486 = vmatmul.mubr.f32.gmra.mxu0 %v396
        %v487 = vpop.f32.mrf.mxu0
        %v488 = vadd.f32 0.0, %v487
        %v489 = vpop.f32.mrf.mxu0
        %490 = vmatprep.mubr.f32.mxu0 0.0
        %491 = vmatmul.mubr.f32.gmra.mxu0 %v399
        %v492 = vpop.f32.mrf.mxu0
        %v493 = vadd.f32 0.0, %v492
        %v494 = vpop.f32.mrf.mxu0
        %495 = vmatprep.mubr.f32.mxu0 0.0
        %496 = vmatmul.mubr.f32.gmra.mxu0 %v402
        %v497 = vpop.f32.mrf.mxu0
        %v498 = vadd.f32 0.0, %v497
        %v499 = vpop.f32.mrf.mxu0
        %500 = vmatprep.mubr.f32.mxu0 0.0
        %501 = vmatmul.mubr.f32.gmra.mxu0 %v405
        %v502 = vpop.f32.mrf.mxu0
        %v503 = vadd.f32 0.0, %v502
        %v504 = vpop.f32.mrf.mxu0
        %505 = vmatprep.mubr.f32.mxu0 0.0
        %506 = vmatmul.mubr.f32.gmra.mxu0 %v408
        %v507 = vpop.f32.mrf.mxu0
        %v508 = vadd.f32 0.0, %v507
        %v509 = vpop.f32.mrf.mxu0
        %510 = vmatprep.mubr.f32.mxu0 0.0
        %511 = vmatmul.mubr.f32.gmra.mxu0 %v411
        %v512 = vpop.f32.mrf.mxu0
        %v513 = vadd.f32 0.0, %v512
        %v514 = vpop.f32.mrf.mxu0
        %515 = vmatprep.mubr.f32.mxu0 0.0
        %516 = vmatmul.mubr.f32.gmra.mxu0 %v414
        %v517 = vpop.f32.mrf.mxu0
        %v518 = vadd.f32 0.0, %v517
        %v519 = vpop.f32.mrf.mxu0
        %520 = vdwg.mxu0
        %vm521 = vcmask 523264
        %522 = vst.msk [vmem:[%s164] sm:$0xff] %vm521, %v483
        %523 = vst.msk [vmem:[%s164 + $0x8] sm:$0xff] %vm521, %v488
        %524 = vst.msk [vmem:[%s164 + $0x10] sm:$0xff] %vm521, %v493
        %525 = vst.msk [vmem:[%s164 + $0x18] sm:$0xff] %vm521, %v498
        %526 = vst.msk [vmem:[%s164 + $0x20] sm:$0xff] %vm521, %v503
        %527 = vst.msk [vmem:[%s164 + $0x28] sm:$0xff] %vm521, %v508
        %528 = vst.msk [vmem:[%s164 + $0x30] sm:$0xff] %vm521, %v513
        %529 = vst.msk [vmem:[%s164 + $0x38] sm:$0xff] %vm521, %v518
        %v530 = vld [vmem:[%s1] sm:$0xff]
        %v531 = vld [vmem:[%s1 + $0x8] sm:$0xff]
        %v532 = vld [vmem:[%s1 + $0x10] sm:$0xff]
        %v533 = vld [vmem:[%s1 + $0x18] sm:$0xff]
        %v534 = vld [vmem:[%s1 + $0x20] sm:$0xff]
        %v535 = vld [vmem:[%s1 + $0x28] sm:$0xff]
        %v536 = vld [vmem:[%s1 + $0x30] sm:$0xff]
        %v537 = vld [vmem:[%s1 + $0x38] sm:$0xff]
        %v539 = vsel %vm190, %v530, 0
        %v542 = vsel %vm190, %v531, 0
        %v545 = vsel %vm190, %v532, 0
        %v548 = vsel %vm190, %v533, 0
        %v551 = vsel %vm190, %v534, 0
        %v554 = vsel %vm190, %v535, 0
        %v557 = vsel %vm190, %v536, 0
        %v560 = vsel %vm190, %v537, 0
        %562 = vmatprep.subr.mxu0 0.0
        %563 = vmatpush1.msra.mxu0 0.0
        %564 = vmatprep.subr.mxu0 0.0
        %565 = vmatpush1.msra.mxu0 0.0
        %566 = vmatprep.subr.mxu0 0.0
        %567 = vmatpush1.msra.mxu0 0.0
        %568 = vmatprep.subr.mxu0 0.0
        %569 = vmatpush1.msra.mxu0 0.0
        %570 = vmatprep.subr.mxu0 0.0
        %571 = vmatpush1.msra.mxu0 0.0
        %572 = vmatprep.subr.mxu0 0.0
        %573 = vmatpush1.msra.mxu0 0.0
        %574 = vmatprep.subr.mxu0 0.0
        %575 = vmatpush1.msra.mxu0 0.0
        %576 = vmatprep.subr.mxu0 0.0
        %577 = vmatpush1.msra.mxu0 0.0
        %578 = vmatprep.subr.mxu0 0.0
        %579 = vmatpush1.msra.mxu0 0.0
        %580 = vmatprep.subr.mxu0 0.0
        %581 = vmatpush1.msra.mxu0 0.0
        %582 = vmatprep.subr.mxu0 0.0
        %583 = vmatpush1.msra.mxu0 0.0
        %584 = vmatprep.subr.mxu0 0.0
        %585 = vmatpush1.msra.mxu0 0.0
        %586 = vmatprep.subr.mxu0 0.0
        %587 = vmatpush1.msra.mxu0 0.0
        %588 = vmatprep.subr.mxu0 0.0
        %589 = vmatpush1.msra.mxu0 0.0
        %590 = vmatprep.subr.mxu0 0.0
        %591 = vmatpush1.msra.mxu0 %v321
        %592 = vmatprep.subr.mxu0 0.0
        %593 = vmatpush1.msra.mxu0 %v316
        %594 = vmatprep.subr.mxu0 0.0
        %595 = vmatpush2.msra.mxu0 0.0
        %596 = vmatprep.subr.mxu0 0.0
        %597 = vmatpush2.msra.mxu0 0.0
        %598 = vmatprep.subr.mxu0 0.0
        %599 = vmatpush2.msra.mxu0 0.0
        %600 = vmatprep.subr.mxu0 0.0
        %601 = vmatpush2.msra.mxu0 0.0
        %602 = vmatprep.subr.mxu0 0.0
        %603 = vmatpush2.msra.mxu0 0.0
        %604 = vmatprep.subr.mxu0 0.0
        %605 = vmatpush2.msra.mxu0 0.0
        %606 = vmatprep.subr.mxu0 0.0
        %607 = vmatpush2.msra.mxu0 0.0
        %608 = vmatprep.subr.mxu0 0.0
        %609 = vmatpush2.msra.mxu0 0.0
        %610 = vmatprep.subr.mxu0 0.0
        %611 = vmatpush2.msra.mxu0 0.0
        %612 = vmatprep.subr.mxu0 0.0
        %613 = vmatpush2.msra.mxu0 0.0
        %614 = vmatprep.subr.mxu0 0.0
        %615 = vmatpush2.msra.mxu0 0.0
        %616 = vmatprep.subr.mxu0 0.0
        %617 = vmatpush2.msra.mxu0 0.0
        %618 = vmatprep.subr.mxu0 0.0
        %619 = vmatpush2.msra.mxu0 0.0
        %620 = vmatprep.subr.mxu0 0.0
        %621 = vmatpush2.msra.mxu0 0.0
        %622 = vmatprep.subr.mxu0 0.0
        %623 = vmatpush2.msra.mxu0 0.0
        %624 = vmatprep.subr.mxu0 0.0
        %625 = vmatpush2.msra.mxu0 0.0
        %626 = vmatprep.mubr.f32.mxu0 0.0
        %627 = vmatmul.mubr.f32.gmra.mxu0 %v539
        %v628 = vpop.f32.mrf.mxu0
        %v629 = vadd.f32 0.0, %v628
        %v630 = vpop.f32.mrf.mxu0
        %631 = vmatprep.mubr.f32.mxu0 0.0
        %632 = vmatmul.mubr.f32.gmra.mxu0 %v542
        %v633 = vpop.f32.mrf.mxu0
        %v634 = vadd.f32 0.0, %v633
        %v635 = vpop.f32.mrf.mxu0
        %636 = vmatprep.mubr.f32.mxu0 0.0
        %637 = vmatmul.mubr.f32.gmra.mxu0 %v545
        %v638 = vpop.f32.mrf.mxu0
        %v639 = vadd.f32 0.0, %v638
        %v640 = vpop.f32.mrf.mxu0
        %641 = vmatprep.mubr.f32.mxu0 0.0
        %642 = vmatmul.mubr.f32.gmra.mxu0 %v548
        %v643 = vpop.f32.mrf.mxu0
        %v644 = vadd.f32 0.0, %v643
        %v645 = vpop.f32.mrf.mxu0
        %646 = vmatprep.mubr.f32.mxu0 0.0
        %647 = vmatmul.mubr.f32.gmra.mxu0 %v551
        %v648 = vpop.f32.mrf.mxu0
        %v649 = vadd.f32 0.0, %v648
        %v650 = vpop.f32.mrf.mxu0
        %651 = vmatprep.mubr.f32.mxu0 0.0
        %652 = vmatmul.mubr.f32.gmra.mxu0 %v554
        %v653 = vpop.f32.mrf.mxu0
        %v654 = vadd.f32 0.0, %v653
        %v655 = vpop.f32.mrf.mxu0
        %656 = vmatprep.mubr.f32.mxu0 0.0
        %657 = vmatmul.mubr.f32.gmra.mxu0 %v557
        %v658 = vpop.f32.mrf.mxu0
        %v659 = vadd.f32 0.0, %v658
        %v660 = vpop.f32.mrf.mxu0
        %661 = vmatprep.mubr.f32.mxu0 0.0
        %662 = vmatmul.mubr.f32.gmra.mxu0 %v560
        %v663 = vpop.f32.mrf.mxu0
        %v664 = vadd.f32 0.0, %v663
        %v665 = vpop.f32.mrf.mxu0
        %666 = vdwg.mxu0
        %s667 = scalar_lea.vmem %s164, 64 [#allocation2]
        %668 = vst.msk [vmem:[%s667] sm:$0xff] %vm521, %v629
        %669 = vst.msk [vmem:[%s667 + $0x8] sm:$0xff] %vm521, %v634
        %670 = vst.msk [vmem:[%s667 + $0x10] sm:$0xff] %vm521, %v639
        %671 = vst.msk [vmem:[%s667 + $0x18] sm:$0xff] %vm521, %v644
        %672 = vst.msk [vmem:[%s667 + $0x20] sm:$0xff] %vm521, %v649
        %673 = vst.msk [vmem:[%s667 + $0x28] sm:$0xff] %vm521, %v654
        %674 = vst.msk [vmem:[%s667 + $0x30] sm:$0xff] %vm521, %v659
        %675 = vst.msk [vmem:[%s667 + $0x38] sm:$0xff] %vm521, %v664
        %v676 = vld [vmem:[%s1] sm:$0xff]
        %v677 = vld [vmem:[%s1 + $0x8] sm:$0xff]
        %v678 = vld [vmem:[%s1 + $0x10] sm:$0xff]
        %v679 = vld [vmem:[%s1 + $0x18] sm:$0xff]
        %v680 = vld [vmem:[%s1 + $0x20] sm:$0xff]
        %v681 = vld [vmem:[%s1 + $0x28] sm:$0xff]
        %v682 = vld [vmem:[%s1 + $0x30] sm:$0xff]
        %v683 = vld [vmem:[%s1 + $0x38] sm:$0xff]
        %v685 = vsel %vm190, %v676, 0
        %v688 = vsel %vm190, %v677, 0
        %v691 = vsel %vm190, %v678, 0
        %v694 = vsel %vm190, %v679, 0
        %v697 = vsel %vm190, %v680, 0
        %v700 = vsel %vm190, %v681, 0
        %v703 = vsel %vm190, %v682, 0
        %v706 = vsel %vm190, %v683, 0
        %708 = vmatprep.subr.mxu0 0.0
        %709 = vmatpush1.msra.mxu0 0.0
        %710 = vmatprep.subr.mxu0 0.0
        %711 = vmatpush1.msra.mxu0 0.0
        %712 = vmatprep.subr.mxu0 0.0
        %713 = vmatpush1.msra.mxu0 0.0
        %714 = vmatprep.subr.mxu0 0.0
        %715 = vmatpush1.msra.mxu0 0.0
        %716 = vmatprep.subr.mxu0 0.0
        %717 = vmatpush1.msra.mxu0 0.0
        %718 = vmatprep.subr.mxu0 0.0
        %719 = vmatpush1.msra.mxu0 0.0
        %720 = vmatprep.subr.mxu0 0.0
        %721 = vmatpush1.msra.mxu0 0.0
        %722 = vmatprep.subr.mxu0 0.0
        %723 = vmatpush1.msra.mxu0 0.0
        %724 = vmatprep.subr.mxu0 0.0
        %725 = vmatpush1.msra.mxu0 0.0
        %726 = vmatprep.subr.mxu0 0.0
        %727 = vmatpush1.msra.mxu0 0.0
        %728 = vmatprep.subr.mxu0 0.0
        %729 = vmatpush1.msra.mxu0 0.0
        %730 = vmatprep.subr.mxu0 0.0
        %731 = vmatpush1.msra.mxu0 0.0
        %732 = vmatprep.subr.mxu0 0.0
        %733 = vmatpush1.msra.mxu0 0.0
        %734 = vmatprep.subr.mxu0 0.0
        %735 = vmatpush1.msra.mxu0 0.0
        %736 = vmatprep.subr.mxu0 0.0
        %737 = vmatpush1.msra.mxu0 %v331
        %738 = vmatprep.subr.mxu0 0.0
        %739 = vmatpush1.msra.mxu0 %v326
        %740 = vmatprep.subr.mxu0 0.0
        %741 = vmatpush2.msra.mxu0 0.0
        %742 = vmatprep.subr.mxu0 0.0
        %743 = vmatpush2.msra.mxu0 0.0
        %744 = vmatprep.subr.mxu0 0.0
        %745 = vmatpush2.msra.mxu0 0.0
        %746 = vmatprep.subr.mxu0 0.0
        %747 = vmatpush2.msra.mxu0 0.0
        %748 = vmatprep.subr.mxu0 0.0
        %749 = vmatpush2.msra.mxu0 0.0
        %750 = vmatprep.subr.mxu0 0.0
        %751 = vmatpush2.msra.mxu0 0.0
        %752 = vmatprep.subr.mxu0 0.0
        %753 = vmatpush2.msra.mxu0 0.0
        %754 = vmatprep.subr.mxu0 0.0
        %755 = vmatpush2.msra.mxu0 0.0
        %756 = vmatprep.subr.mxu0 0.0
        %757 = vmatpush2.msra.mxu0 0.0
        %758 = vmatprep.subr.mxu0 0.0
        %759 = vmatpush2.msra.mxu0 0.0
        %760 = vmatprep.subr.mxu0 0.0
        %761 = vmatpush2.msra.mxu0 0.0
        %762 = vmatprep.subr.mxu0 0.0
        %763 = vmatpush2.msra.mxu0 0.0
        %764 = vmatprep.subr.mxu0 0.0
        %765 = vmatpush2.msra.mxu0 0.0
        %766 = vmatprep.subr.mxu0 0.0
        %767 = vmatpush2.msra.mxu0 0.0
        %768 = vmatprep.subr.mxu0 0.0
        %769 = vmatpush2.msra.mxu0 0.0
        %770 = vmatprep.subr.mxu0 0.0
        %771 = vmatpush2.msra.mxu0 0.0
        %772 = vmatprep.mubr.f32.mxu0 0.0
        %773 = vmatmul.mubr.f32.gmra.mxu0 %v685
        %v774 = vpop.f32.mrf.mxu0
        %v775 = vadd.f32 0.0, %v774
        %v776 = vpop.f32.mrf.mxu0
        %777 = vmatprep.mubr.f32.mxu0 0.0
        %778 = vmatmul.mubr.f32.gmra.mxu0 %v688
        %v779 = vpop.f32.mrf.mxu0
        %v780 = vadd.f32 0.0, %v779
        %v781 = vpop.f32.mrf.mxu0
        %782 = vmatprep.mubr.f32.mxu0 0.0
        %783 = vmatmul.mubr.f32.gmra.mxu0 %v691
        %v784 = vpop.f32.mrf.mxu0
        %v785 = vadd.f32 0.0, %v784
        %v786 = vpop.f32.mrf.mxu0
        %787 = vmatprep.mubr.f32.mxu0 0.0
        %788 = vmatmul.mubr.f32.gmra.mxu0 %v694
        %v789 = vpop.f32.mrf.mxu0
        %v790 = vadd.f32 0.0, %v789
        %v791 = vpop.f32.mrf.mxu0
        %792 = vmatprep.mubr.f32.mxu0 0.0
        %793 = vmatmul.mubr.f32.gmra.mxu0 %v697
        %v794 = vpop.f32.mrf.mxu0
        %v795 = vadd.f32 0.0, %v794
        %v796 = vpop.f32.mrf.mxu0
        %797 = vmatprep.mubr.f32.mxu0 0.0
        %798 = vmatmul.mubr.f32.gmra.mxu0 %v700
        %v799 = vpop.f32.mrf.mxu0
        %v800 = vadd.f32 0.0, %v799
        %v801 = vpop.f32.mrf.mxu0
        %802 = vmatprep.mubr.f32.mxu0 0.0
        %803 = vmatmul.mubr.f32.gmra.mxu0 %v703
        %v804 = vpop.f32.mrf.mxu0
        %v805 = vadd.f32 0.0, %v804
        %v806 = vpop.f32.mrf.mxu0
        %807 = vmatprep.mubr.f32.mxu0 0.0
        %808 = vmatmul.mubr.f32.gmra.mxu0 %v706
        %v809 = vpop.f32.mrf.mxu0
        %v810 = vadd.f32 0.0, %v809
        %v811 = vpop.f32.mrf.mxu0
        %812 = vdwg.mxu0
        %s813 = scalar_lea.vmem %s164, 128 [#allocation2]
        %814 = vst.msk [vmem:[%s813] sm:$0xff] %vm521, %v775
        %815 = vst.msk [vmem:[%s813 + $0x8] sm:$0xff] %vm521, %v780
        %816 = vst.msk [vmem:[%s813 + $0x10] sm:$0xff] %vm521, %v785
        %817 = vst.msk [vmem:[%s813 + $0x18] sm:$0xff] %vm521, %v790
        %818 = vst.msk [vmem:[%s813 + $0x20] sm:$0xff] %vm521, %v795
        %819 = vst.msk [vmem:[%s813 + $0x28] sm:$0xff] %vm521, %v800
        %820 = vst.msk [vmem:[%s813 + $0x30] sm:$0xff] %vm521, %v805
        %821 = vst.msk [vmem:[%s813 + $0x38] sm:$0xff] %vm521, %v810
        %v822 = vld [vmem:[%s1] sm:$0xff]
        %v823 = vld [vmem:[%s1 + $0x8] sm:$0xff]
        %v824 = vld [vmem:[%s1 + $0x10] sm:$0xff]
        %v825 = vld [vmem:[%s1 + $0x18] sm:$0xff]
        %v826 = vld [vmem:[%s1 + $0x20] sm:$0xff]
        %v827 = vld [vmem:[%s1 + $0x28] sm:$0xff]
        %v828 = vld [vmem:[%s1 + $0x30] sm:$0xff]
        %v829 = vld [vmem:[%s1 + $0x38] sm:$0xff]
        %v831 = vsel %vm190, %v822, 0
        %v834 = vsel %vm190, %v823, 0
        %v837 = vsel %vm190, %v824, 0
        %v840 = vsel %vm190, %v825, 0
        %v843 = vsel %vm190, %v826, 0
        %v846 = vsel %vm190, %v827, 0
        %v849 = vsel %vm190, %v828, 0
        %v852 = vsel %vm190, %v829, 0
        %854 = vmatprep.subr.mxu0 0.0
        %855 = vmatpush1.msra.mxu0 0.0
        %856 = vmatprep.subr.mxu0 0.0
        %857 = vmatpush1.msra.mxu0 0.0
        %858 = vmatprep.subr.mxu0 0.0
        %859 = vmatpush1.msra.mxu0 0.0
        %860 = vmatprep.subr.mxu0 0.0
        %861 = vmatpush1.msra.mxu0 0.0
        %862 = vmatprep.subr.mxu0 0.0
        %863 = vmatpush1.msra.mxu0 0.0
        %864 = vmatprep.subr.mxu0 0.0
        %865 = vmatpush1.msra.mxu0 0.0
        %866 = vmatprep.subr.mxu0 0.0
        %867 = vmatpush1.msra.mxu0 0.0
        %868 = vmatprep.subr.mxu0 0.0
        %869 = vmatpush1.msra.mxu0 0.0
        %870 = vmatprep.subr.mxu0 0.0
        %871 = vmatpush1.msra.mxu0 0.0
        %872 = vmatprep.subr.mxu0 0.0
        %873 = vmatpush1.msra.mxu0 0.0
        %874 = vmatprep.subr.mxu0 0.0
        %875 = vmatpush1.msra.mxu0 0.0
        %876 = vmatprep.subr.mxu0 0.0
        %877 = vmatpush1.msra.mxu0 0.0
        %878 = vmatprep.subr.mxu0 0.0
        %879 = vmatpush1.msra.mxu0 0.0
        %880 = vmatprep.subr.mxu0 0.0
        %881 = vmatpush1.msra.mxu0 0.0
        %882 = vmatprep.subr.mxu0 0.0
        %883 = vmatpush1.msra.mxu0 %v341
        %884 = vmatprep.subr.mxu0 0.0
        %885 = vmatpush1.msra.mxu0 %v336
        %886 = vmatprep.subr.mxu0 0.0
        %887 = vmatpush2.msra.mxu0 0.0
        %888 = vmatprep.subr.mxu0 0.0
        %889 = vmatpush2.msra.mxu0 0.0
        %890 = vmatprep.subr.mxu0 0.0
        %891 = vmatpush2.msra.mxu0 0.0
        %892 = vmatprep.subr.mxu0 0.0
        %893 = vmatpush2.msra.mxu0 0.0
        %894 = vmatprep.subr.mxu0 0.0
        %895 = vmatpush2.msra.mxu0 0.0
        %896 = vmatprep.subr.mxu0 0.0
        %897 = vmatpush2.msra.mxu0 0.0
        %898 = vmatprep.subr.mxu0 0.0
        %899 = vmatpush2.msra.mxu0 0.0
        %900 = vmatprep.subr.mxu0 0.0
        %901 = vmatpush2.msra.mxu0 0.0
        %902 = vmatprep.subr.mxu0 0.0
        %903 = vmatpush2.msra.mxu0 0.0
        %904 = vmatprep.subr.mxu0 0.0
        %905 = vmatpush2.msra.mxu0 0.0
        %906 = vmatprep.subr.mxu0 0.0
        %907 = vmatpush2.msra.mxu0 0.0
        %908 = vmatprep.subr.mxu0 0.0
        %909 = vmatpush2.msra.mxu0 0.0
        %910 = vmatprep.subr.mxu0 0.0
        %911 = vmatpush2.msra.mxu0 0.0
        %912 = vmatprep.subr.mxu0 0.0
        %913 = vmatpush2.msra.mxu0 0.0
        %914 = vmatprep.subr.mxu0 0.0
        %915 = vmatpush2.msra.mxu0 0.0
        %916 = vmatprep.subr.mxu0 0.0
        %917 = vmatpush2.msra.mxu0 0.0
        %918 = vmatprep.mubr.f32.mxu0 0.0
        %919 = vmatmul.mubr.f32.gmra.mxu0 %v831
        %v920 = vpop.f32.mrf.mxu0
        %v921 = vadd.f32 0.0, %v920
        %v922 = vpop.f32.mrf.mxu0
        %923 = vmatprep.mubr.f32.mxu0 0.0
        %924 = vmatmul.mubr.f32.gmra.mxu0 %v834
        %v925 = vpop.f32.mrf.mxu0
        %v926 = vadd.f32 0.0, %v925
        %v927 = vpop.f32.mrf.mxu0
        %928 = vmatprep.mubr.f32.mxu0 0.0
        %929 = vmatmul.mubr.f32.gmra.mxu0 %v837
        %v930 = vpop.f32.mrf.mxu0
        %v931 = vadd.f32 0.0, %v930
        %v932 = vpop.f32.mrf.mxu0
        %933 = vmatprep.mubr.f32.mxu0 0.0
        %934 = vmatmul.mubr.f32.gmra.mxu0 %v840
        %v935 = vpop.f32.mrf.mxu0
        %v936 = vadd.f32 0.0, %v935
        %v937 = vpop.f32.mrf.mxu0
        %938 = vmatprep.mubr.f32.mxu0 0.0
        %939 = vmatmul.mubr.f32.gmra.mxu0 %v843
        %v940 = vpop.f32.mrf.mxu0
        %v941 = vadd.f32 0.0, %v940
        %v942 = vpop.f32.mrf.mxu0
        %943 = vmatprep.mubr.f32.mxu0 0.0
        %944 = vmatmul.mubr.f32.gmra.mxu0 %v846
        %v945 = vpop.f32.mrf.mxu0
        %v946 = vadd.f32 0.0, %v945
        %v947 = vpop.f32.mrf.mxu0
        %948 = vmatprep.mubr.f32.mxu0 0.0
        %949 = vmatmul.mubr.f32.gmra.mxu0 %v849
        %v950 = vpop.f32.mrf.mxu0
        %v951 = vadd.f32 0.0, %v950
        %v952 = vpop.f32.mrf.mxu0
        %953 = vmatprep.mubr.f32.mxu0 0.0
        %954 = vmatmul.mubr.f32.gmra.mxu0 %v852
        %v955 = vpop.f32.mrf.mxu0
        %v956 = vadd.f32 0.0, %v955
        %v957 = vpop.f32.mrf.mxu0
        %958 = vdwg.mxu0
        %s959 = scalar_lea.vmem %s164, 192 [#allocation2]
        %960 = vst.msk [vmem:[%s959] sm:$0xff] %vm521, %v921
        %961 = vst.msk [vmem:[%s959 + $0x8] sm:$0xff] %vm521, %v926
        %962 = vst.msk [vmem:[%s959 + $0x10] sm:$0xff] %vm521, %v931
        %963 = vst.msk [vmem:[%s959 + $0x18] sm:$0xff] %vm521, %v936
        %964 = vst.msk [vmem:[%s959 + $0x20] sm:$0xff] %vm521, %v941
        %965 = vst.msk [vmem:[%s959 + $0x28] sm:$0xff] %vm521, %v946
        %966 = vst.msk [vmem:[%s959 + $0x30] sm:$0xff] %vm521, %v951
        %967 = vst.msk [vmem:[%s959 + $0x38] sm:$0xff] %vm521, %v956
        %v968 = vld [vmem:[%s1] sm:$0xff]
        %v969 = vld [vmem:[%s1 + $0x8] sm:$0xff]
        %v970 = vld [vmem:[%s1 + $0x10] sm:$0xff]
        %v971 = vld [vmem:[%s1 + $0x18] sm:$0xff]
        %v972 = vld [vmem:[%s1 + $0x20] sm:$0xff]
        %v973 = vld [vmem:[%s1 + $0x28] sm:$0xff]
        %v974 = vld [vmem:[%s1 + $0x30] sm:$0xff]
        %v975 = vld [vmem:[%s1 + $0x38] sm:$0xff]
        %v977 = vsel %vm190, %v968, 0
        %v980 = vsel %vm190, %v969, 0
        %v983 = vsel %vm190, %v970, 0
        %v986 = vsel %vm190, %v971, 0
        %v989 = vsel %vm190, %v972, 0
        %v992 = vsel %vm190, %v973, 0
        %v995 = vsel %vm190, %v974, 0
        %v998 = vsel %vm190, %v975, 0
        %1000 = vmatprep.subr.mxu0 0.0
        %1001 = vmatpush1.msra.mxu0 0.0
        %1002 = vmatprep.subr.mxu0 0.0
        %1003 = vmatpush1.msra.mxu0 0.0
        %1004 = vmatprep.subr.mxu0 0.0
        %1005 = vmatpush1.msra.mxu0 0.0
        %1006 = vmatprep.subr.mxu0 0.0
        %1007 = vmatpush1.msra.mxu0 0.0
        %1008 = vmatprep.subr.mxu0 0.0
        %1009 = vmatpush1.msra.mxu0 0.0
        %1010 = vmatprep.subr.mxu0 0.0
        %1011 = vmatpush1.msra.mxu0 0.0
        %1012 = vmatprep.subr.mxu0 0.0
        %1013 = vmatpush1.msra.mxu0 0.0
        %1014 = vmatprep.subr.mxu0 0.0
        %1015 = vmatpush1.msra.mxu0 0.0
        %1016 = vmatprep.subr.mxu0 0.0
        %1017 = vmatpush1.msra.mxu0 0.0
        %1018 = vmatprep.subr.mxu0 0.0
        %1019 = vmatpush1.msra.mxu0 0.0
        %1020 = vmatprep.subr.mxu0 0.0
        %1021 = vmatpush1.msra.mxu0 0.0
        %1022 = vmatprep.subr.mxu0 0.0
        %1023 = vmatpush1.msra.mxu0 0.0
        %1024 = vmatprep.subr.mxu0 0.0
        %1025 = vmatpush1.msra.mxu0 0.0
        %1026 = vmatprep.subr.mxu0 0.0
        %1027 = vmatpush1.msra.mxu0 0.0
        %1028 = vmatprep.subr.mxu0 0.0
        %1029 = vmatpush1.msra.mxu0 %v351
        %1030 = vmatprep.subr.mxu0 0.0
        %1031 = vmatpush1.msra.mxu0 %v346
        %1032 = vmatprep.subr.mxu0 0.0
        %1033 = vmatpush2.msra.mxu0 0.0
        %1034 = vmatprep.subr.mxu0 0.0
        %1035 = vmatpush2.msra.mxu0 0.0
        %1036 = vmatprep.subr.mxu0 0.0
        %1037 = vmatpush2.msra.mxu0 0.0
        %1038 = vmatprep.subr.mxu0 0.0
        %1039 = vmatpush2.msra.mxu0 0.0
        %1040 = vmatprep.subr.mxu0 0.0
        %1041 = vmatpush2.msra.mxu0 0.0
        %1042 = vmatprep.subr.mxu0 0.0
        %1043 = vmatpush2.msra.mxu0 0.0
        %1044 = vmatprep.subr.mxu0 0.0
        %1045 = vmatpush2.msra.mxu0 0.0
        %1046 = vmatprep.subr.mxu0 0.0
        %1047 = vmatpush2.msra.mxu0 0.0
        %1048 = vmatprep.subr.mxu0 0.0
        %1049 = vmatpush2.msra.mxu0 0.0
        %1050 = vmatprep.subr.mxu0 0.0
        %1051 = vmatpush2.msra.mxu0 0.0
        %1052 = vmatprep.subr.mxu0 0.0
        %1053 = vmatpush2.msra.mxu0 0.0
        %1054 = vmatprep.subr.mxu0 0.0
        %1055 = vmatpush2.msra.mxu0 0.0
        %1056 = vmatprep.subr.mxu0 0.0
        %1057 = vmatpush2.msra.mxu0 0.0
        %1058 = vmatprep.subr.mxu0 0.0
        %1059 = vmatpush2.msra.mxu0 0.0
        %1060 = vmatprep.subr.mxu0 0.0
        %1061 = vmatpush2.msra.mxu0 0.0
        %1062 = vmatprep.subr.mxu0 0.0
        %1063 = vmatpush2.msra.mxu0 0.0
        %1064 = vmatprep.mubr.f32.mxu0 0.0
        %1065 = vmatmul.mubr.f32.gmra.mxu0 %v977
        %v1066 = vpop.f32.mrf.mxu0
        %v1067 = vadd.f32 0.0, %v1066
        %v1068 = vpop.f32.mrf.mxu0
        %1069 = vmatprep.mubr.f32.mxu0 0.0
        %1070 = vmatmul.mubr.f32.gmra.mxu0 %v980
        %v1071 = vpop.f32.mrf.mxu0
        %v1072 = vadd.f32 0.0, %v1071
        %v1073 = vpop.f32.mrf.mxu0
        %1074 = vmatprep.mubr.f32.mxu0 0.0
        %1075 = vmatmul.mubr.f32.gmra.mxu0 %v983
        %v1076 = vpop.f32.mrf.mxu0
        %v1077 = vadd.f32 0.0, %v1076
        %v1078 = vpop.f32.mrf.mxu0
        %1079 = vmatprep.mubr.f32.mxu0 0.0
        %1080 = vmatmul.mubr.f32.gmra.mxu0 %v986
        %v1081 = vpop.f32.mrf.mxu0
        %v1082 = vadd.f32 0.0, %v1081
        %v1083 = vpop.f32.mrf.mxu0
        %1084 = vmatprep.mubr.f32.mxu0 0.0
        %1085 = vmatmul.mubr.f32.gmra.mxu0 %v989
        %v1086 = vpop.f32.mrf.mxu0
        %v1087 = vadd.f32 0.0, %v1086
        %v1088 = vpop.f32.mrf.mxu0
        %1089 = vmatprep.mubr.f32.mxu0 0.0
        %1090 = vmatmul.mubr.f32.gmra.mxu0 %v992
        %v1091 = vpop.f32.mrf.mxu0
        %v1092 = vadd.f32 0.0, %v1091
        %v1093 = vpop.f32.mrf.mxu0
        %1094 = vmatprep.mubr.f32.mxu0 0.0
        %1095 = vmatmul.mubr.f32.gmra.mxu0 %v995
        %v1096 = vpop.f32.mrf.mxu0
        %v1097 = vadd.f32 0.0, %v1096
        %v1098 = vpop.f32.mrf.mxu0
        %1099 = vmatprep.mubr.f32.mxu0 0.0
        %1100 = vmatmul.mubr.f32.gmra.mxu0 %v998
        %v1101 = vpop.f32.mrf.mxu0
        %v1102 = vadd.f32 0.0, %v1101
        %v1103 = vpop.f32.mrf.mxu0
        %1104 = vdwg.mxu0
        %s1105 = scalar_lea.vmem %s164, 256 [#allocation2]
        %1106 = vst.msk [vmem:[%s1105] sm:$0xff] %vm521, %v1067
        %1107 = vst.msk [vmem:[%s1105 + $0x8] sm:$0xff] %vm521, %v1072
        %1108 = vst.msk [vmem:[%s1105 + $0x10] sm:$0xff] %vm521, %v1077
        %1109 = vst.msk [vmem:[%s1105 + $0x18] sm:$0xff] %vm521, %v1082
        %1110 = vst.msk [vmem:[%s1105 + $0x20] sm:$0xff] %vm521, %v1087
        %1111 = vst.msk [vmem:[%s1105 + $0x28] sm:$0xff] %vm521, %v1092
        %1112 = vst.msk [vmem:[%s1105 + $0x30] sm:$0xff] %vm521, %v1097
        %1113 = vst.msk [vmem:[%s1105 + $0x38] sm:$0xff] %vm521, %v1102
        %v1114 = vld [vmem:[%s1] sm:$0xff]
        %v1115 = vld [vmem:[%s1 + $0x8] sm:$0xff]
        %v1116 = vld [vmem:[%s1 + $0x10] sm:$0xff]
        %v1117 = vld [vmem:[%s1 + $0x18] sm:$0xff]
        %v1118 = vld [vmem:[%s1 + $0x20] sm:$0xff]
        %v1119 = vld [vmem:[%s1 + $0x28] sm:$0xff]
        %v1120 = vld [vmem:[%s1 + $0x30] sm:$0xff]
        %v1121 = vld [vmem:[%s1 + $0x38] sm:$0xff]
        %v1123 = vsel %vm190, %v1114, 0
        %v1126 = vsel %vm190, %v1115, 0
        %v1129 = vsel %vm190, %v1116, 0
        %v1132 = vsel %vm190, %v1117, 0
        %v1135 = vsel %vm190, %v1118, 0
        %v1138 = vsel %vm190, %v1119, 0
        %v1141 = vsel %vm190, %v1120, 0
        %v1144 = vsel %vm190, %v1121, 0
        %1146 = vmatprep.subr.mxu0 0.0
        %1147 = vmatpush1.msra.mxu0 0.0
        %1148 = vmatprep.subr.mxu0 0.0
        %1149 = vmatpush1.msra.mxu0 0.0
        %1150 = vmatprep.subr.mxu0 0.0
        %1151 = vmatpush1.msra.mxu0 0.0
        %1152 = vmatprep.subr.mxu0 0.0
        %1153 = vmatpush1.msra.mxu0 0.0
        %1154 = vmatprep.subr.mxu0 0.0
        %1155 = vmatpush1.msra.mxu0 0.0
        %1156 = vmatprep.subr.mxu0 0.0
        %1157 = vmatpush1.msra.mxu0 0.0
        %1158 = vmatprep.subr.mxu0 0.0
        %1159 = vmatpush1.msra.mxu0 0.0
        %1160 = vmatprep.subr.mxu0 0.0
        %1161 = vmatpush1.msra.mxu0 0.0
        %1162 = vmatprep.subr.mxu0 0.0
        %1163 = vmatpush1.msra.mxu0 0.0
        %1164 = vmatprep.subr.mxu0 0.0
        %1165 = vmatpush1.msra.mxu0 0.0
        %1166 = vmatprep.subr.mxu0 0.0
        %1167 = vmatpush1.msra.mxu0 0.0
        %1168 = vmatprep.subr.mxu0 0.0
        %1169 = vmatpush1.msra.mxu0 0.0
        %1170 = vmatprep.subr.mxu0 0.0
        %1171 = vmatpush1.msra.mxu0 0.0
        %1172 = vmatprep.subr.mxu0 0.0
        %1173 = vmatpush1.msra.mxu0 0.0
        %1174 = vmatprep.subr.mxu0 0.0
        %1175 = vmatpush1.msra.mxu0 %v361
        %1176 = vmatprep.subr.mxu0 0.0
        %1177 = vmatpush1.msra.mxu0 %v356
        %1178 = vmatprep.subr.mxu0 0.0
        %1179 = vmatpush2.msra.mxu0 0.0
        %1180 = vmatprep.subr.mxu0 0.0
        %1181 = vmatpush2.msra.mxu0 0.0
        %1182 = vmatprep.subr.mxu0 0.0
        %1183 = vmatpush2.msra.mxu0 0.0
        %1184 = vmatprep.subr.mxu0 0.0
        %1185 = vmatpush2.msra.mxu0 0.0
        %1186 = vmatprep.subr.mxu0 0.0
        %1187 = vmatpush2.msra.mxu0 0.0
        %1188 = vmatprep.subr.mxu0 0.0
        %1189 = vmatpush2.msra.mxu0 0.0
        %1190 = vmatprep.subr.mxu0 0.0
        %1191 = vmatpush2.msra.mxu0 0.0
        %1192 = vmatprep.subr.mxu0 0.0
        %1193 = vmatpush2.msra.mxu0 0.0
        %1194 = vmatprep.subr.mxu0 0.0
        %1195 = vmatpush2.msra.mxu0 0.0
        %1196 = vmatprep.subr.mxu0 0.0
        %1197 = vmatpush2.msra.mxu0 0.0
        %1198 = vmatprep.subr.mxu0 0.0
        %1199 = vmatpush2.msra.mxu0 0.0
        %1200 = vmatprep.subr.mxu0 0.0
        %1201 = vmatpush2.msra.mxu0 0.0
        %1202 = vmatprep.subr.mxu0 0.0
        %1203 = vmatpush2.msra.mxu0 0.0
        %1204 = vmatprep.subr.mxu0 0.0
        %1205 = vmatpush2.msra.mxu0 0.0
        %1206 = vmatprep.subr.mxu0 0.0
        %1207 = vmatpush2.msra.mxu0 0.0
        %1208 = vmatprep.subr.mxu0 0.0
        %1209 = vmatpush2.msra.mxu0 0.0
        %1210 = vmatprep.mubr.f32.mxu0 0.0
        %1211 = vmatmul.mubr.f32.gmra.mxu0 %v1123
        %v1212 = vpop.f32.mrf.mxu0
        %v1213 = vadd.f32 0.0, %v1212
        %v1214 = vpop.f32.mrf.mxu0
        %1215 = vmatprep.mubr.f32.mxu0 0.0
        %1216 = vmatmul.mubr.f32.gmra.mxu0 %v1126
        %v1217 = vpop.f32.mrf.mxu0
        %v1218 = vadd.f32 0.0, %v1217
        %v1219 = vpop.f32.mrf.mxu0
        %1220 = vmatprep.mubr.f32.mxu0 0.0
        %1221 = vmatmul.mubr.f32.gmra.mxu0 %v1129
        %v1222 = vpop.f32.mrf.mxu0
        %v1223 = vadd.f32 0.0, %v1222
        %v1224 = vpop.f32.mrf.mxu0
        %1225 = vmatprep.mubr.f32.mxu0 0.0
        %1226 = vmatmul.mubr.f32.gmra.mxu0 %v1132
        %v1227 = vpop.f32.mrf.mxu0
        %v1228 = vadd.f32 0.0, %v1227
        %v1229 = vpop.f32.mrf.mxu0
        %1230 = vmatprep.mubr.f32.mxu0 0.0
        %1231 = vmatmul.mubr.f32.gmra.mxu0 %v1135
        %v1232 = vpop.f32.mrf.mxu0
        %v1233 = vadd.f32 0.0, %v1232
        %v1234 = vpop.f32.mrf.mxu0
        %1235 = vmatprep.mubr.f32.mxu0 0.0
        %1236 = vmatmul.mubr.f32.gmra.mxu0 %v1138
        %v1237 = vpop.f32.mrf.mxu0
        %v1238 = vadd.f32 0.0, %v1237
        %v1239 = vpop.f32.mrf.mxu0
        %1240 = vmatprep.mubr.f32.mxu0 0.0
        %1241 = vmatmul.mubr.f32.gmra.mxu0 %v1141
        %v1242 = vpop.f32.mrf.mxu0
        %v1243 = vadd.f32 0.0, %v1242
        %v1244 = vpop.f32.mrf.mxu0
        %1245 = vmatprep.mubr.f32.mxu0 0.0
        %1246 = vmatmul.mubr.f32.gmra.mxu0 %v1144
        %v1247 = vpop.f32.mrf.mxu0
        %v1248 = vadd.f32 0.0, %v1247
        %v1249 = vpop.f32.mrf.mxu0
        %1250 = vdwg.mxu0
        %s1251 = scalar_lea.vmem %s164, 320 [#allocation2]
        %1252 = vst.msk [vmem:[%s1251] sm:$0xff] %vm521, %v1213
        %1253 = vst.msk [vmem:[%s1251 + $0x8] sm:$0xff] %vm521, %v1218
        %1254 = vst.msk [vmem:[%s1251 + $0x10] sm:$0xff] %vm521, %v1223
        %1255 = vst.msk [vmem:[%s1251 + $0x18] sm:$0xff] %vm521, %v1228
        %1256 = vst.msk [vmem:[%s1251 + $0x20] sm:$0xff] %vm521, %v1233
        %1257 = vst.msk [vmem:[%s1251 + $0x28] sm:$0xff] %vm521, %v1238
        %1258 = vst.msk [vmem:[%s1251 + $0x30] sm:$0xff] %vm521, %v1243
        %1259 = vst.msk [vmem:[%s1251 + $0x38] sm:$0xff] %vm521, %v1248
        %v1260 = vld [vmem:[%s1] sm:$0xff]
        %v1261 = vld [vmem:[%s1 + $0x8] sm:$0xff]
        %v1262 = vld [vmem:[%s1 + $0x10] sm:$0xff]
        %v1263 = vld [vmem:[%s1 + $0x18] sm:$0xff]
        %v1264 = vld [vmem:[%s1 + $0x20] sm:$0xff]
        %v1265 = vld [vmem:[%s1 + $0x28] sm:$0xff]
        %v1266 = vld [vmem:[%s1 + $0x30] sm:$0xff]
        %v1267 = vld [vmem:[%s1 + $0x38] sm:$0xff]
        %v1269 = vsel %vm190, %v1260, 0
        %v1272 = vsel %vm190, %v1261, 0
        %v1275 = vsel %vm190, %v1262, 0
        %v1278 = vsel %vm190, %v1263, 0
        %v1281 = vsel %vm190, %v1264, 0
        %v1284 = vsel %vm190, %v1265, 0
        %v1287 = vsel %vm190, %v1266, 0
        %v1290 = vsel %vm190, %v1267, 0
        %1292 = vmatprep.subr.mxu0 0.0
        %1293 = vmatpush1.msra.mxu0 0.0
        %1294 = vmatprep.subr.mxu0 0.0
        %1295 = vmatpush1.msra.mxu0 0.0
        %1296 = vmatprep.subr.mxu0 0.0
        %1297 = vmatpush1.msra.mxu0 0.0
        %1298 = vmatprep.subr.mxu0 0.0
        %1299 = vmatpush1.msra.mxu0 0.0
        %1300 = vmatprep.subr.mxu0 0.0
        %1301 = vmatpush1.msra.mxu0 0.0
        %1302 = vmatprep.subr.mxu0 0.0
        %1303 = vmatpush1.msra.mxu0 0.0
        %1304 = vmatprep.subr.mxu0 0.0
        %1305 = vmatpush1.msra.mxu0 0.0
        %1306 = vmatprep.subr.mxu0 0.0
        %1307 = vmatpush1.msra.mxu0 0.0
        %1308 = vmatprep.subr.mxu0 0.0
        %1309 = vmatpush1.msra.mxu0 0.0
        %1310 = vmatprep.subr.mxu0 0.0
        %1311 = vmatpush1.msra.mxu0 0.0
        %1312 = vmatprep.subr.mxu0 0.0
        %1313 = vmatpush1.msra.mxu0 0.0
        %1314 = vmatprep.subr.mxu0 0.0
        %1315 = vmatpush1.msra.mxu0 0.0
        %1316 = vmatprep.subr.mxu0 0.0
        %1317 = vmatpush1.msra.mxu0 0.0
        %1318 = vmatprep.subr.mxu0 0.0
        %1319 = vmatpush1.msra.mxu0 0.0
        %1320 = vmatprep.subr.mxu0 0.0
        %1321 = vmatpush1.msra.mxu0 %v371
        %1322 = vmatprep.subr.mxu0 0.0
        %1323 = vmatpush1.msra.mxu0 %v366
        %1324 = vmatprep.subr.mxu0 0.0
        %1325 = vmatpush2.msra.mxu0 0.0
        %1326 = vmatprep.subr.mxu0 0.0
        %1327 = vmatpush2.msra.mxu0 0.0
        %1328 = vmatprep.subr.mxu0 0.0
        %1329 = vmatpush2.msra.mxu0 0.0
        %1330 = vmatprep.subr.mxu0 0.0
        %1331 = vmatpush2.msra.mxu0 0.0
        %1332 = vmatprep.subr.mxu0 0.0
        %1333 = vmatpush2.msra.mxu0 0.0
        %1334 = vmatprep.subr.mxu0 0.0
        %1335 = vmatpush2.msra.mxu0 0.0
        %1336 = vmatprep.subr.mxu0 0.0
        %1337 = vmatpush2.msra.mxu0 0.0
        %1338 = vmatprep.subr.mxu0 0.0
        %1339 = vmatpush2.msra.mxu0 0.0
        %1340 = vmatprep.subr.mxu0 0.0
        %1341 = vmatpush2.msra.mxu0 0.0
        %1342 = vmatprep.subr.mxu0 0.0
        %1343 = vmatpush2.msra.mxu0 0.0
        %1344 = vmatprep.subr.mxu0 0.0
        %1345 = vmatpush2.msra.mxu0 0.0
        %1346 = vmatprep.subr.mxu0 0.0
        %1347 = vmatpush2.msra.mxu0 0.0
        %1348 = vmatprep.subr.mxu0 0.0
        %1349 = vmatpush2.msra.mxu0 0.0
        %1350 = vmatprep.subr.mxu0 0.0
        %1351 = vmatpush2.msra.mxu0 0.0
        %1352 = vmatprep.subr.mxu0 0.0
        %1353 = vmatpush2.msra.mxu0 0.0
        %1354 = vmatprep.subr.mxu0 0.0
        %1355 = vmatpush2.msra.mxu0 0.0
        %1356 = vmatprep.mubr.f32.mxu0 0.0
        %1357 = vmatmul.mubr.f32.gmra.mxu0 %v1269
        %v1358 = vpop.f32.mrf.mxu0
        %v1359 = vadd.f32 0.0, %v1358
        %v1360 = vpop.f32.mrf.mxu0
        %1361 = vmatprep.mubr.f32.mxu0 0.0
        %1362 = vmatmul.mubr.f32.gmra.mxu0 %v1272
        %v1363 = vpop.f32.mrf.mxu0
        %v1364 = vadd.f32 0.0, %v1363
        %v1365 = vpop.f32.mrf.mxu0
        %1366 = vmatprep.mubr.f32.mxu0 0.0
        %1367 = vmatmul.mubr.f32.gmra.mxu0 %v1275
        %v1368 = vpop.f32.mrf.mxu0
        %v1369 = vadd.f32 0.0, %v1368
        %v1370 = vpop.f32.mrf.mxu0
        %1371 = vmatprep.mubr.f32.mxu0 0.0
        %1372 = vmatmul.mubr.f32.gmra.mxu0 %v1278
        %v1373 = vpop.f32.mrf.mxu0
        %v1374 = vadd.f32 0.0, %v1373
        %v1375 = vpop.f32.mrf.mxu0
        %1376 = vmatprep.mubr.f32.mxu0 0.0
        %1377 = vmatmul.mubr.f32.gmra.mxu0 %v1281
        %v1378 = vpop.f32.mrf.mxu0
        %v1379 = vadd.f32 0.0, %v1378
        %v1380 = vpop.f32.mrf.mxu0
        %1381 = vmatprep.mubr.f32.mxu0 0.0
        %1382 = vmatmul.mubr.f32.gmra.mxu0 %v1284
        %v1383 = vpop.f32.mrf.mxu0
        %v1384 = vadd.f32 0.0, %v1383
        %v1385 = vpop.f32.mrf.mxu0
        %1386 = vmatprep.mubr.f32.mxu0 0.0
        %1387 = vmatmul.mubr.f32.gmra.mxu0 %v1287
        %v1388 = vpop.f32.mrf.mxu0
        %v1389 = vadd.f32 0.0, %v1388
        %v1390 = vpop.f32.mrf.mxu0
        %1391 = vmatprep.mubr.f32.mxu0 0.0
        %1392 = vmatmul.mubr.f32.gmra.mxu0 %v1290
        %v1393 = vpop.f32.mrf.mxu0
        %v1394 = vadd.f32 0.0, %v1393
        %v1395 = vpop.f32.mrf.mxu0
        %1396 = vdwg.mxu0
        %s1397 = scalar_lea.vmem %s164, 384 [#allocation2]
        %1398 = vst.msk [vmem:[%s1397] sm:$0xff] %vm521, %v1359
        %1399 = vst.msk [vmem:[%s1397 + $0x8] sm:$0xff] %vm521, %v1364
        %1400 = vst.msk [vmem:[%s1397 + $0x10] sm:$0xff] %vm521, %v1369
        %1401 = vst.msk [vmem:[%s1397 + $0x18] sm:$0xff] %vm521, %v1374
        %1402 = vst.msk [vmem:[%s1397 + $0x20] sm:$0xff] %vm521, %v1379
        %1403 = vst.msk [vmem:[%s1397 + $0x28] sm:$0xff] %vm521, %v1384
        %1404 = vst.msk [vmem:[%s1397 + $0x30] sm:$0xff] %vm521, %v1389
        %1405 = vst.msk [vmem:[%s1397 + $0x38] sm:$0xff] %vm521, %v1394
        %v1406 = vld [vmem:[%s1] sm:$0xff]
        %v1407 = vld [vmem:[%s1 + $0x8] sm:$0xff]
        %v1408 = vld [vmem:[%s1 + $0x10] sm:$0xff]
        %v1409 = vld [vmem:[%s1 + $0x18] sm:$0xff]
        %v1410 = vld [vmem:[%s1 + $0x20] sm:$0xff]
        %v1411 = vld [vmem:[%s1 + $0x28] sm:$0xff]
        %v1412 = vld [vmem:[%s1 + $0x30] sm:$0xff]
        %v1413 = vld [vmem:[%s1 + $0x38] sm:$0xff]
        %v1415 = vsel %vm190, %v1406, 0
        %v1418 = vsel %vm190, %v1407, 0
        %v1421 = vsel %vm190, %v1408, 0
        %v1424 = vsel %vm190, %v1409, 0
        %v1427 = vsel %vm190, %v1410, 0
        %v1430 = vsel %vm190, %v1411, 0
        %v1433 = vsel %vm190, %v1412, 0
        %v1436 = vsel %vm190, %v1413, 0
        %1438 = vmatprep.subr.mxu0 0.0
        %1439 = vmatpush1.msra.mxu0 0.0
        %1440 = vmatprep.subr.mxu0 0.0
        %1441 = vmatpush1.msra.mxu0 0.0
        %1442 = vmatprep.subr.mxu0 0.0
        %1443 = vmatpush1.msra.mxu0 0.0
        %1444 = vmatprep.subr.mxu0 0.0
        %1445 = vmatpush1.msra.mxu0 0.0
        %1446 = vmatprep.subr.mxu0 0.0
        %1447 = vmatpush1.msra.mxu0 0.0
        %1448 = vmatprep.subr.mxu0 0.0
        %1449 = vmatpush1.msra.mxu0 0.0
        %1450 = vmatprep.subr.mxu0 0.0
        %1451 = vmatpush1.msra.mxu0 0.0
        %1452 = vmatprep.subr.mxu0 0.0
        %1453 = vmatpush1.msra.mxu0 0.0
        %1454 = vmatprep.subr.mxu0 0.0
        %1455 = vmatpush1.msra.mxu0 0.0
        %1456 = vmatprep.subr.mxu0 0.0
        %1457 = vmatpush1.msra.mxu0 0.0
        %1458 = vmatprep.subr.mxu0 0.0
        %1459 = vmatpush1.msra.mxu0 0.0
        %1460 = vmatprep.subr.mxu0 0.0
        %1461 = vmatpush1.msra.mxu0 0.0
        %1462 = vmatprep.subr.mxu0 0.0
        %1463 = vmatpush1.msra.mxu0 0.0
        %1464 = vmatprep.subr.mxu0 0.0
        %1465 = vmatpush1.msra.mxu0 0.0
        %1466 = vmatprep.subr.mxu0 0.0
        %1467 = vmatpush1.msra.mxu0 %v381
        %1468 = vmatprep.subr.mxu0 0.0
        %1469 = vmatpush1.msra.mxu0 %v376
        %1470 = vmatprep.subr.mxu0 0.0
        %1471 = vmatpush2.msra.mxu0 0.0
        %1472 = vmatprep.subr.mxu0 0.0
        %1473 = vmatpush2.msra.mxu0 0.0
        %1474 = vmatprep.subr.mxu0 0.0
        %1475 = vmatpush2.msra.mxu0 0.0
        %1476 = vmatprep.subr.mxu0 0.0
        %1477 = vmatpush2.msra.mxu0 0.0
        %1478 = vmatprep.subr.mxu0 0.0
        %1479 = vmatpush2.msra.mxu0 0.0
        %1480 = vmatprep.subr.mxu0 0.0
        %1481 = vmatpush2.msra.mxu0 0.0
        %1482 = vmatprep.subr.mxu0 0.0
        %1483 = vmatpush2.msra.mxu0 0.0
        %1484 = vmatprep.subr.mxu0 0.0
        %1485 = vmatpush2.msra.mxu0 0.0
        %1486 = vmatprep.subr.mxu0 0.0
        %1487 = vmatpush2.msra.mxu0 0.0
        %1488 = vmatprep.subr.mxu0 0.0
        %1489 = vmatpush2.msra.mxu0 0.0
        %1490 = vmatprep.subr.mxu0 0.0
        %1491 = vmatpush2.msra.mxu0 0.0
        %1492 = vmatprep.subr.mxu0 0.0
        %1493 = vmatpush2.msra.mxu0 0.0
        %1494 = vmatprep.subr.mxu0 0.0
        %1495 = vmatpush2.msra.mxu0 0.0
        %1496 = vmatprep.subr.mxu0 0.0
        %1497 = vmatpush2.msra.mxu0 0.0
        %1498 = vmatprep.subr.mxu0 0.0
        %1499 = vmatpush2.msra.mxu0 0.0
        %1500 = vmatprep.subr.mxu0 0.0
        %1501 = vmatpush2.msra.mxu0 0.0
        %1502 = vmatprep.mubr.f32.mxu0 0.0
        %1503 = vmatmul.mubr.f32.gmra.mxu0 %v1415
        %v1504 = vpop.f32.mrf.mxu0
        %v1505 = vadd.f32 0.0, %v1504
        %v1506 = vpop.f32.mrf.mxu0
        %1507 = vmatprep.mubr.f32.mxu0 0.0
        %1508 = vmatmul.mubr.f32.gmra.mxu0 %v1418
        %v1509 = vpop.f32.mrf.mxu0
        %v1510 = vadd.f32 0.0, %v1509
        %v1511 = vpop.f32.mrf.mxu0
        %1512 = vmatprep.mubr.f32.mxu0 0.0
        %1513 = vmatmul.mubr.f32.gmra.mxu0 %v1421
        %v1514 = vpop.f32.mrf.mxu0
        %v1515 = vadd.f32 0.0, %v1514
        %v1516 = vpop.f32.mrf.mxu0
        %1517 = vmatprep.mubr.f32.mxu0 0.0
        %1518 = vmatmul.mubr.f32.gmra.mxu0 %v1424
        %v1519 = vpop.f32.mrf.mxu0
        %v1520 = vadd.f32 0.0, %v1519
        %v1521 = vpop.f32.mrf.mxu0
        %1522 = vmatprep.mubr.f32.mxu0 0.0
        %1523 = vmatmul.mubr.f32.gmra.mxu0 %v1427
        %v1524 = vpop.f32.mrf.mxu0
        %v1525 = vadd.f32 0.0, %v1524
        %v1526 = vpop.f32.mrf.mxu0
        %1527 = vmatprep.mubr.f32.mxu0 0.0
        %1528 = vmatmul.mubr.f32.gmra.mxu0 %v1430
        %v1529 = vpop.f32.mrf.mxu0
        %v1530 = vadd.f32 0.0, %v1529
        %v1531 = vpop.f32.mrf.mxu0
        %1532 = vmatprep.mubr.f32.mxu0 0.0
        %1533 = vmatmul.mubr.f32.gmra.mxu0 %v1433
        %v1534 = vpop.f32.mrf.mxu0
        %v1535 = vadd.f32 0.0, %v1534
        %v1536 = vpop.f32.mrf.mxu0
        %1537 = vmatprep.mubr.f32.mxu0 0.0
        %1538 = vmatmul.mubr.f32.gmra.mxu0 %v1436
        %v1539 = vpop.f32.mrf.mxu0
        %v1540 = vadd.f32 0.0, %v1539
        %v1541 = vpop.f32.mrf.mxu0
        %1542 = vdwg.mxu0
        %s1543 = scalar_lea.vmem %s164, 448 [#allocation2]
        %1544 = vst.msk [vmem:[%s1543] sm:$0xff] %vm521, %v1505
        %1545 = vst.msk [vmem:[%s1543 + $0x8] sm:$0xff] %vm521, %v1510
        %1546 = vst.msk [vmem:[%s1543 + $0x10] sm:$0xff] %vm521, %v1515
        %1547 = vst.msk [vmem:[%s1543 + $0x18] sm:$0xff] %vm521, %v1520
        %1548 = vst.msk [vmem:[%s1543 + $0x20] sm:$0xff] %vm521, %v1525
        %1549 = vst.msk [vmem:[%s1543 + $0x28] sm:$0xff] %vm521, %v1530
        %1550 = vst.msk [vmem:[%s1543 + $0x30] sm:$0xff] %vm521, %v1535
        %1551 = vst.msk [vmem:[%s1543 + $0x38] sm:$0xff] %vm521, %v1540
        %s1552 = sand.u32 %s93, 1
        %s1553 = scalar_lea.sflag [#allocation3], %s1552
        %s1554 = sand.u32 %s93, 1
        %s1555 = smul.addr %s1554, 512
        %s1556 = scalar_lea.vmem [#allocation2], %s1555
        // Predicated region
        $region33: #{segformer_wrapper_forward.3} parent=31 // pred_check
          %p1557 = pneg %p103
        $region34: #{segformer_wrapper_forward.3} parent=31 // pred_check_branch
          %1559 = sbr.rel (%p1557) target = $region36
        $region35: #{segformer_wrapper_forward.3} parent=31 // pred_region
          %s1560 = smul.u32 8, %s17
          %s1562 = ssub.s32 8192, 8192
          %1563 = vsyncadd %s1553, %s1562
          %s1564 = smul.addr %s1560, 8
          %s1565 = smul.addr %s1564, 128
          %s1566 = scalar_lea.hbm %s3, %s1565
          %s1567 = sshll.u32 %s1556, 4
          %s1568 = int_to_ptr.vmem [resolvable:$true] %s1567
          %1573 = dma.vmem_to_hbm [thread:$0]  %s1568, 8192, %s1566, %s1553, 128, 128, 8
        $region36: #{segformer_wrapper_forward.3} parent=31 // pred_fallthru
          _
      $region32: #{segformer_wrapper_forward.3} parent=5 // pred_fallthru
        _
      %p1574 = scmp.le.s32.totalorder 2, %s12
      // Predicated region
      $region37: #{segformer_wrapper_forward.3} parent=5 // pred_check
        %p1575 = pneg %p1574
      $region38: #{segformer_wrapper_forward.3} parent=5 // pred_check_branch
        %1577 = sbr.rel (%p1575) target = $region40
      $region39: #{segformer_wrapper_forward.3} parent=5 // pred_region
        %s1578 = ssub.s32 %s12, 2
        // Predicated region
        $region41: #{segformer_wrapper_forward.3} parent=39 // pred_check
          %p1579 = pneg %p109
        $region42: #{segformer_wrapper_forward.3} parent=39 // pred_check_branch
          %1581 = sbr.rel (%p1579) target = $region44
        $region43: #{segformer_wrapper_forward.3} parent=39 // pred_region
          %s1582 = sand.u32 %s94, 1
          %s1583 = scalar_lea.sflag [#allocation3], %s1582
          %s1584 = sand.u32 %s94, 1
          %s1585 = smul.addr %s1584, 512
          %s1586 = scalar_lea.vmem [#allocation2], %s1585
          %1587 = dma.done %s1583, 8192
        $region44: #{segformer_wrapper_forward.3} parent=39 // pred_fallthru
          _
      $region40: #{segformer_wrapper_forward.3} parent=5 // pred_fallthru
        _
    $region6: #{segformer_wrapper_forward.3} parent=1 // loop_footer
      %s16 = sadd.s32 1, %s12
    $region7: #{segformer_wrapper_forward.3} parent=1 // loop_footer_branch
      %11 = sbr.rel target = $region3
    $region8: #{segformer_wrapper_forward.3} parent=1 // loop_exit
      _
    %1588 = vsyncpa [#allocation3], 1
    %s1589 = scalar_lea.sflag [#allocation3], 1
    %1590 = vsyncpa %s1589, 1

</llo_original>
